<compile_context>
chip_gen: v6e
topology: v6e:2x2x1
jax: 0.10.0
libtpu: 0.0.40
codegen_flags: <defaults>
</compile_context>

<pallas_src>
import functools

import jax
import jax.numpy as jnp
import numpy as np
from jax.experimental import pallas as pl
from jax.experimental.pallas import tpu as pltpu


def _yolo_decode_kernel(x_ref, boxes_ref, confs_ref, *, num_anchors,
                        scale_x_y, W, H, anchors):
    """One program per (batch element, HW tile).

    x_ref     : VMEM (1, A, 5+C, T)  input dtype (f32 or bf16)
    boxes_ref : VMEM (1, A, 4,   T)  f32  (rows: bx, by, bw, bh)
    confs_ref : VMEM (1, A, C,   T)  bf16 (or f32)
    `anchors` is a static tuple (aw0, ah0, aw1, ah1, ...) already divided by
    the stride, as in the PyTorch reference.
    """
    T = x_ref.shape[-1]
    off = 0.5 * (scale_x_y - 1.0)

    # grid_x / grid_y generated in-kernel (no HBM input), offset by the HW
    # tile index, with the sigmoid offset and 1/W, 1/H normalization folded in:
    #   bx = sigmoid(tx)*(sxy/W) + (gx - off)/W   (row 0)
    #   by = sigmoid(ty)*(sxy/H) + (gy - off)/H   (row 1)
    row = jax.lax.broadcasted_iota(jnp.int32, (2, T), 0)
    lane = jax.lax.broadcasted_iota(jnp.int32, (2, T), 1)
    is_x_row = row == 0
    i = (lane + pl.program_id(1) * T).astype(jnp.float32)     # flat pixel idx
    # f32 floor-divide; exact for i << 2^21 (the +0.5 guards f32 rounding) and
    # avoids the long int32 div/mod VPU sequences.
    gy = jnp.floor((i + 0.5) * (1.0 / W))
    gx = i - gy * W
    grid_shift = jnp.where(is_x_row, (gx - off) * (1.0 / W), (gy - off) * (1.0 / H))
    sig_scale = jnp.where(is_x_row, scale_x_y / W, scale_x_y / H)

    for a in range(num_anchors):                 # static unroll (A is small)
        # box center: sigmoid of rows 0:1, scaled + shifted
        bxy = jax.nn.sigmoid(x_ref[0, a, 0:2, :].astype(jnp.float32)) \
            * sig_scale + grid_shift
        # box size: exp of rows 2:3, scaled by (anchor / feature size)
        anchor_scale = jnp.where(is_x_row, anchors[2 * a] / W, anchors[2 * a + 1] / H)
        bwh = jnp.exp(x_ref[0, a, 2:4, :].astype(jnp.float32)) * anchor_scale
        boxes_ref[0, a, 0:2, :] = bxy
        boxes_ref[0, a, 2:4, :] = bwh

        # objectness + class scores: one fused sigmoid over the (1+C, T) slab.
        # TODO(synk): on v6e/v7x the class-logit sigmoid could run in bf16 on
        # the EUP (~2x transcendental throughput) once the memory roof is
        # gone; kept in f32 here for bit-closeness to the reference.
        s = jax.nn.sigmoid(x_ref[0, a, 4:, :].astype(jnp.float32))
        confs_ref[0, a, :, :] = (s[1:, :] * s[0:1, :]).astype(confs_ref.dtype)


def _pick_hw_tile(HW, max_tile=1024):
    """Lane-tile size: full HW if small, else a multiple of 128 (exact divisor
    preferred; otherwise the last grid block is partial and Pallas masks the
    out-of-bounds lanes)."""
    if HW <= max_tile:
        return HW                       # block dim == full array dim is legal
    for t in range(max_tile - max_tile % 128, 127, -128):
        if HW % t == 0:
            return t
    return 512                          # partial last block, masked by Pallas


def yolo_decode_pallas(output, num_classes, masked_anchors, num_anchors,
                       scale_x_y=1.0, *, confs_dtype=jnp.bfloat16,
                       channel_major=False, hw_tile=None):
    """output: (B, A*(5+num_classes), H, W) NCHW, f32 or bf16."""
    B, C_in, H, W = output.shape
    A = num_anchors
    n_ch = 5 + num_classes
    assert C_in == A * n_ch
    HW = H * W

    # glue: pure view reshape (no copy, no dtype conversion; kernel upcasts).
    x = output.reshape(B, A, n_ch, HW)

    T = int(hw_tile) if hw_tile is not None else _pick_hw_tile(HW)
    n_hw = pl.cdiv(HW, T)

    kernel = functools.partial(
        _yolo_decode_kernel,
        num_anchors=A,
        scale_x_y=float(scale_x_y),
        W=W, H=H,
        anchors=tuple(float(a) for a in masked_anchors),
    )

    boxes_cm, confs_cm = pl.pallas_call(
        kernel,
        out_shape=(jax.ShapeDtypeStruct((B, A, 4, HW), jnp.float32),
                   jax.ShapeDtypeStruct((B, A, num_classes, HW), confs_dtype)),
        grid_spec=pl.GridSpec(
            grid=(B, n_hw),
            in_specs=[pl.BlockSpec((1, A, n_ch, T), lambda b, t: (b, 0, 0, t))],
            out_specs=(pl.BlockSpec((1, A, 4, T), lambda b, t: (b, 0, 0, t)),
                       pl.BlockSpec((1, A, num_classes, T),
                                    lambda b, t: (b, 0, 0, t))),
        ),
        compiler_params=pltpu.CompilerParams(
            dimension_semantics=("parallel", "parallel"),
        ),
    )(x)

    if channel_major:
        # Fast path: downstream consumes channel-major (B, A, C, HW) directly,
        # no extra HBM pass over the outputs.
        return boxes_cm, confs_cm

    # glue: PyTorch output convention.
    # TODO(synk): these transposes re-move every output byte in HBM; prefer
    # channel_major=True when the downstream NMS can take (B, A, C, HW).
    boxes = boxes_cm.transpose(0, 1, 3, 2).reshape(B, A * HW, 4)
    confs = confs_cm.transpose(0, 1, 3, 2).reshape(B, A * HW, num_classes)
    return boxes, confs


class YoloLayer:
    """JAX/Pallas port of the PyTorch YoloLayer (inference path only)."""

    def __init__(self, img_size, anchor_masks=(), num_classes=80, anchors=(),
                 num_anchors=9, scale_x_y=1.0, *, confs_dtype=jnp.bfloat16,
                 channel_major=False, hw_tile=None):
        self.anchor_masks = [list(m) for m in anchor_masks]
        self.num_classes = num_classes
        self.anchors = list(np.asarray(anchors).reshape(-1).tolist())
        self.num_anchors = num_anchors
        self.anchor_step = len(self.anchors) // num_anchors
        self.scale_x_y = scale_x_y
        self.feature_length = [img_size[0] // 8, img_size[0] // 16, img_size[0] // 32]
        self.img_size = img_size
        self.confs_dtype = confs_dtype
        self.channel_major = channel_major
        self.hw_tile = hw_tile
        self.training = False

    def forward(self, output):
        if self.training:
            return output
        in_w = output.shape[3]
        anchor_index = self.anchor_masks[self.feature_length.index(in_w)]
        stride_w = self.img_size[0] / in_w
        masked_anchors = []
        for m in anchor_index:
            masked_anchors += self.anchors[m * self.anchor_step:(m + 1) * self.anchor_step]
        masked_anchors = [a / stride_w for a in masked_anchors]
        self.masked_anchors = masked_anchors
        return yolo_decode_pallas(output, self.num_classes, masked_anchors,
                                  len(anchor_index), scale_x_y=self.scale_x_y,
                                  confs_dtype=self.confs_dtype,
                                  channel_major=self.channel_major,
                                  hw_tile=self.hw_tile)

    __call__ = forward


# ---- pure-JAX reference for validation ----
def yolo_decode_ref(output, num_classes, masked_anchors, A, scale_x_y):
    B, _, H, W = output.shape
    n_ch = 5 + num_classes
    out = output.astype(jnp.float32).reshape(B, A, n_ch, H, W).transpose(0, 1, 3, 4, 2)
    off = 0.5 * (scale_x_y - 1.0)
    gx = jnp.arange(W, dtype=jnp.float32)[None, None, None, :]
    gy = jnp.arange(H, dtype=jnp.float32)[None, None, :, None]
    bx = jax.nn.sigmoid(out[..., 0]) * scale_x_y - off + gx
    by = jax.nn.sigmoid(out[..., 1]) * scale_x_y - off + gy
    aw = jnp.asarray(masked_anchors[0::2], jnp.float32)[None, :, None, None]
    ah = jnp.asarray(masked_anchors[1::2], jnp.float32)[None, :, None, None]
    bw = jnp.exp(out[..., 2]) * aw
    bh = jnp.exp(out[..., 3]) * ah
    bx, by, bw, bh = bx / W, by / H, bw / W, bh / H
    det = jax.nn.sigmoid(out[..., 4])
    cls = jax.nn.sigmoid(out[..., 5:])
    boxes = jnp.stack([bx, by, bw, bh], axis=-1).reshape(B, A * H * W, 4)
    confs = (cls * det[..., None]).reshape(B, A * H * W, num_classes)
    return boxes, confs


def _check(boxes, confs, boxes_ref, confs_ref):
    np.testing.assert_allclose(np.asarray(boxes, dtype=np.float32),
                               np.asarray(boxes_ref, dtype=np.float32),
                               rtol=1e-5, atol=1e-5)
    # confs are emitted in bf16 -> relaxed tolerance
    np.testing.assert_allclose(np.asarray(jnp.asarray(confs, jnp.float32)),
                               np.asarray(confs_ref, dtype=np.float32),
                               rtol=2e-2, atol=2e-3)


if __name__ == "__main__":
    num_classes = 80
    anchors = [12, 16, 19, 36, 40, 28, 36, 75, 76, 55, 72, 146, 142, 110, 192, 243, 459, 401]
    anchor_masks = [[0, 1, 2], [3, 4, 5], [6, 7, 8]]
    key = jax.random.PRNGKey(0)
    B = 2
    C = 3 * (5 + num_classes)

    # --- Test 1: img 128x128, 16x16 head (stride 8); single HW tile ---
    layer1 = YoloLayer((128, 128), anchor_masks=anchor_masks, num_classes=num_classes,
                       anchors=anchors, num_anchors=9, scale_x_y=1.05)
    k1, k2 = jax.random.split(key)
    x1 = jax.random.normal(k1, (B, C, 16, 16), dtype=jnp.float32)
    boxes1, confs1 = jax.block_until_ready(layer1(x1))
    b1_ref, c1_ref = yolo_decode_ref(x1, num_classes, layer1.masked_anchors, 3, 1.05)
    _check(boxes1, confs1, b1_ref, c1_ref)
    assert boxes1.shape == (B, 3 * 16 * 16, 4)
    assert confs1.shape == (B, 3 * 16 * 16, num_classes)

    # --- Test 2: img 608x608, 19x19 head (stride 32); hw_tile=128 exercises
    #     the tile-offset iota and the masked partial last block (361 lanes). ---
    layer2 = YoloLayer((608, 608), anchor_masks=anchor_masks, num_classes=num_classes,
                       anchors=anchors, num_anchors=9, scale_x_y=1.05, hw_tile=128)
    x2 = jax.random.normal(k2, (B, C, 19, 19), dtype=jnp.float32)
    boxes2, confs2 = jax.block_until_ready(layer2(x2))
    b2_ref, c2_ref = yolo_decode_ref(x2, num_classes, layer2.masked_anchors, 3, 1.05)
    _check(boxes2, confs2, b2_ref, c2_ref)
    assert boxes2.shape == (B, 3 * 19 * 19, 4)
    assert confs2.shape == (B, 3 * 19 * 19, num_classes)

    print("KERNEL_OK")
</pallas_src>

<mosaic_0001>
module attributes {stable_mosaic.version = 11 : i64} {
  func.func @_yolo_decode_kernel(%arg0: i32, %arg1: i32, %arg2: memref<1x3x85x256xf32, #tpu.memory_space<vmem>>, %arg3: memref<1x3x4x256xf32, #tpu.memory_space<vmem>>, %arg4: memref<1x3x80x256xbf16, #tpu.memory_space<vmem>>) attributes {dimension_semantics = [#tpu.dimension_semantics<parallel>, #tpu.dimension_semantics<parallel>], iteration_bounds = array<i64: 2, 1>, scalar_prefetch = 0 : i64, scratch_operands = 0 : i64, tpu.core_type = #tpu.core_type<tc>, window_params = [{transform_indices = @transform_0, window_bounds = array<i64: 1, 3, 85, 256>}, {transform_indices = @transform_1, window_bounds = array<i64: 1, 3, 4, 256>}, {transform_indices = @transform_2, window_bounds = array<i64: 1, 3, 80, 256>}]} {
    %0 = tpu.iota {dimensions = array<i32: 0>} : vector<2x256xi32>
    %1 = tpu.iota {dimensions = array<i32: 1>} : vector<2x256xi32>
    %c0_i32 = arith.constant 0 : i32
    %2 = vector.broadcast %c0_i32 : i32 to vector<2x256xi32>
    %3 = arith.cmpi eq, %0, %2 : vector<2x256xi32>
    %c256_i32 = arith.constant 256 : i32
    %4 = arith.muli %arg1, %c256_i32 : i32
    %5 = vector.broadcast %4 : i32 to vector<2x256xi32>
    %6 = arith.addi %1, %5 : vector<2x256xi32>
    %7 = arith.sitofp %6 : vector<2x256xi32> to vector<2x256xf32>
    %cst = arith.constant 5.000000e-01 : f32
    %8 = vector.broadcast %cst : f32 to vector<2x256xf32>
    %9 = arith.addf %7, %8 : vector<2x256xf32>
    %cst_0 = arith.constant 6.250000e-02 : f32
    %10 = vector.broadcast %cst_0 : f32 to vector<2x256xf32>
    %11 = arith.mulf %9, %10 : vector<2x256xf32>
    %12 = math.floor %11 : vector<2x256xf32>
    %cst_1 = arith.constant 1.600000e+01 : f32
    %13 = vector.broadcast %cst_1 : f32 to vector<2x256xf32>
    %14 = arith.mulf %12, %13 : vector<2x256xf32>
    %15 = arith.subf %7, %14 : vector<2x256xf32>
    %cst_2 = arith.constant 2.500000e-02 : f32
    %16 = vector.broadcast %cst_2 : f32 to vector<2x256xf32>
    %17 = arith.subf %15, %16 : vector<2x256xf32>
    %cst_3 = arith.constant 6.250000e-02 : f32
    %18 = vector.broadcast %cst_3 : f32 to vector<2x256xf32>
    %19 = arith.mulf %17, %18 : vector<2x256xf32>
    %cst_4 = arith.constant 2.500000e-02 : f32
    %20 = vector.broadcast %cst_4 : f32 to vector<2x256xf32>
    %21 = arith.subf %12, %20 : vector<2x256xf32>
    %cst_5 = arith.constant 6.250000e-02 : f32
    %22 = vector.broadcast %cst_5 : f32 to vector<2x256xf32>
    %23 = arith.mulf %21, %22 : vector<2x256xf32>
    %24 = arith.select %3, %19, %23 : vector<2x256xi1>, vector<2x256xf32>
    %cst_6 = arith.constant 6.562500e-02 : f32
    %cst_7 = arith.constant 6.562500e-02 : f32
    %25 = vector.broadcast %cst_6 : f32 to vector<2x256xf32>
    %26 = vector.broadcast %cst_7 : f32 to vector<2x256xf32>
    %27 = arith.select %3, %25, %26 : vector<2x256xi1>, vector<2x256xf32>
    %c0 = arith.constant 0 : index
    %c0_8 = arith.constant 0 : index
    %c0_9 = arith.constant 0 : index
    %c0_10 = arith.constant 0 : index
    %28 = vector.load %arg2[%c0, %c0_8, %c0_9, %c0_10] : memref<1x3x85x256xf32, #tpu.memory_space<vmem>>, vector<1x1x2x256xf32>
    %29 = vector.shape_cast %28 : vector<1x1x2x256xf32> to vector<2x256xf32>
    %30 = arith.negf %29 : vector<2x256xf32>
    %31 = math.exp %30 : vector<2x256xf32>
    %cst_11 = arith.constant 1.000000e+00 : f32
    %32 = vector.broadcast %cst_11 : f32 to vector<2x256xf32>
    %33 = arith.addf %32, %31 : vector<2x256xf32>
    %34 = arith.divf %32, %33 : vector<2x256xf32>
    %35 = arith.mulf %34, %27 : vector<2x256xf32>
    %36 = arith.addf %35, %24 : vector<2x256xf32>
    %cst_12 = arith.constant 9.375000e-02 : f32
    %cst_13 = arith.constant 1.250000e-01 : f32
    %37 = vector.broadcast %cst_12 : f32 to vector<2x256xf32>
    %38 = vector.broadcast %cst_13 : f32 to vector<2x256xf32>
    %39 = arith.select %3, %37, %38 : vector<2x256xi1>, vector<2x256xf32>
    %c0_14 = arith.constant 0 : index
    %c0_15 = arith.constant 0 : index
    %c2 = arith.constant 2 : index
    %c0_16 = arith.constant 0 : index
    %40 = vector.load %arg2[%c0_14, %c0_15, %c2, %c0_16] : memref<1x3x85x256xf32, #tpu.memory_space<vmem>>, vector<1x1x2x256xf32>
    %41 = vector.shape_cast %40 : vector<1x1x2x256xf32> to vector<2x256xf32>
    %42 = math.exp %41 : vector<2x256xf32>
    %43 = arith.mulf %42, %39 : vector<2x256xf32>
    %c0_17 = arith.constant 0 : index
    %c0_18 = arith.constant 0 : index
    %c0_19 = arith.constant 0 : index
    %c0_20 = arith.constant 0 : index
    %44 = vector.load %arg3[%c0_17, %c0_18, %c0_19, %c0_20] : memref<1x3x4x256xf32, #tpu.memory_space<vmem>>, vector<1x1x2x256xf32>
    %45 = vector.shape_cast %44 : vector<1x1x2x256xf32> to vector<2x256xf32>
    %46 = vector.shape_cast %36 : vector<2x256xf32> to vector<1x1x2x256xf32>
    tpu.vector_store %arg3[%c0_17, %c0_18, %c0_19, %c0_20], %46 {strides = array<i32>} : memref<1x3x4x256xf32, #tpu.memory_space<vmem>>, vector<1x1x2x256xf32>,
    %c0_21 = arith.constant 0 : index
    %c0_22 = arith.constant 0 : index
    %c2_23 = arith.constant 2 : index
    %c0_24 = arith.constant 0 : index
    %47 = vector.load %arg3[%c0_21, %c0_22, %c2_23, %c0_24] : memref<1x3x4x256xf32, #tpu.memory_space<vmem>>, vector<1x1x2x256xf32>
    %48 = vector.shape_cast %47 : vector<1x1x2x256xf32> to vector<2x256xf32>
    %49 = vector.shape_cast %43 : vector<2x256xf32> to vector<1x1x2x256xf32>
    tpu.vector_store %arg3[%c0_21, %c0_22, %c2_23, %c0_24], %49 {strides = array<i32>} : memref<1x3x4x256xf32, #tpu.memory_space<vmem>>, vector<1x1x2x256xf32>,
    %c0_25 = arith.constant 0 : index
    %c0_26 = arith.constant 0 : index
    %c4 = arith.constant 4 : index
    %c0_27 = arith.constant 0 : index
    %50 = vector.load %arg2[%c0_25, %c0_26, %c4, %c0_27] : memref<1x3x85x256xf32, #tpu.memory_space<vmem>>, vector<1x1x81x256xf32>
    %51 = vector.shape_cast %50 : vector<1x1x81x256xf32> to vector<81x256xf32>
    %52 = arith.negf %51 : vector<81x256xf32>
    %53 = math.exp %52 : vector<81x256xf32>
    %cst_28 = arith.constant 1.000000e+00 : f32
    %54 = vector.broadcast %cst_28 : f32 to vector<81x256xf32>
    %55 = arith.addf %54, %53 : vector<81x256xf32>
    %56 = arith.divf %54, %55 : vector<81x256xf32>
    %57 = vector.extract_strided_slice %56 {offsets = [1, 0], sizes = [80, 256], strides = [1, 1]} : vector<81x256xf32> to vector<80x256xf32>
    %58 = vector.extract_strided_slice %56 {offsets = [0, 0], sizes = [1, 256], strides = [1, 1]} : vector<81x256xf32> to vector<1x256xf32>
    %59 = vector.broadcast %58 : vector<1x256xf32> to vector<80x256xf32>
    %60 = arith.mulf %57, %59 : vector<80x256xf32>
    %61 = arith.truncf %60 : vector<80x256xf32> to vector<80x256xbf16>
    %c0_29 = arith.constant 0 : index
    %c0_30 = arith.constant 0 : index
    %c0_31 = arith.constant 0 : index
    %c0_32 = arith.constant 0 : index
    %62 = vector.load %arg4[%c0_29, %c0_30, %c0_31, %c0_32] : memref<1x3x80x256xbf16, #tpu.memory_space<vmem>>, vector<1x1x80x256xbf16>
    %63 = vector.shape_cast %62 : vector<1x1x80x256xbf16> to vector<80x256xbf16>
    %64 = vector.shape_cast %61 : vector<80x256xbf16> to vector<1x1x80x256xbf16>
    tpu.vector_store %arg4[%c0_29, %c0_30, %c0_31, %c0_32], %64 {strides = array<i32>} : memref<1x3x80x256xbf16, #tpu.memory_space<vmem>>, vector<1x1x80x256xbf16>,
    %c0_33 = arith.constant 0 : index
    %c1 = arith.constant 1 : index
    %c0_34 = arith.constant 0 : index
    %c0_35 = arith.constant 0 : index
    %65 = vector.load %arg2[%c0_33, %c1, %c0_34, %c0_35] : memref<1x3x85x256xf32, #tpu.memory_space<vmem>>, vector<1x1x2x256xf32>
    %66 = vector.shape_cast %65 : vector<1x1x2x256xf32> to vector<2x256xf32>
    %67 = arith.negf %66 : vector<2x256xf32>
    %68 = math.exp %67 : vector<2x256xf32>
    %cst_36 = arith.constant 1.000000e+00 : f32
    %69 = vector.broadcast %cst_36 : f32 to vector<2x256xf32>
    %70 = arith.addf %69, %68 : vector<2x256xf32>
    %71 = arith.divf %69, %70 : vector<2x256xf32>
    %72 = arith.mulf %71, %27 : vector<2x256xf32>
    %73 = arith.addf %72, %24 : vector<2x256xf32>
    %cst_37 = arith.constant 0.1484375 : f32
    %cst_38 = arith.constant 2.812500e-01 : f32
    %74 = vector.broadcast %cst_37 : f32 to vector<2x256xf32>
    %75 = vector.broadcast %cst_38 : f32 to vector<2x256xf32>
    %76 = arith.select %3, %74, %75 : vector<2x256xi1>, vector<2x256xf32>
    %c0_39 = arith.constant 0 : index
    %c1_40 = arith.constant 1 : index
    %c2_41 = arith.constant 2 : index
    %c0_42 = arith.constant 0 : index
    %77 = vector.load %arg2[%c0_39, %c1_40, %c2_41, %c0_42] : memref<1x3x85x256xf32, #tpu.memory_space<vmem>>, vector<1x1x2x256xf32>
    %78 = vector.shape_cast %77 : vector<1x1x2x256xf32> to vector<2x256xf32>
    %79 = math.exp %78 : vector<2x256xf32>
    %80 = arith.mulf %79, %76 : vector<2x256xf32>
    %c0_43 = arith.constant 0 : index
    %c1_44 = arith.constant 1 : index
    %c0_45 = arith.constant 0 : index
    %c0_46 = arith.constant 0 : index
    %81 = vector.load %arg3[%c0_43, %c1_44, %c0_45, %c0_46] : memref<1x3x4x256xf32, #tpu.memory_space<vmem>>, vector<1x1x2x256xf32>
    %82 = vector.shape_cast %81 : vector<1x1x2x256xf32> to vector<2x256xf32>
    %83 = vector.shape_cast %73 : vector<2x256xf32> to vector<1x1x2x256xf32>
    tpu.vector_store %arg3[%c0_43, %c1_44, %c0_45, %c0_46], %83 {strides = array<i32>} : memref<1x3x4x256xf32, #tpu.memory_space<vmem>>, vector<1x1x2x256xf32>,
    %c0_47 = arith.constant 0 : index
    %c1_48 = arith.constant 1 : index
    %c2_49 = arith.constant 2 : index
    %c0_50 = arith.constant 0 : index
    %84 = vector.load %arg3[%c0_47, %c1_48, %c2_49, %c0_50] : memref<1x3x4x256xf32, #tpu.memory_space<vmem>>, vector<1x1x2x256xf32>
    %85 = vector.shape_cast %84 : vector<1x1x2x256xf32> to vector<2x256xf32>
    %86 = vector.shape_cast %80 : vector<2x256xf32> to vector<1x1x2x256xf32>
    tpu.vector_store %arg3[%c0_47, %c1_48, %c2_49, %c0_50], %86 {strides = array<i32>} : memref<1x3x4x256xf32, #tpu.memory_space<vmem>>, vector<1x1x2x256xf32>,
    %c0_51 = arith.constant 0 : index
    %c1_52 = arith.constant 1 : index
    %c4_53 = arith.constant 4 : index
    %c0_54 = arith.constant 0 : index
    %87 = vector.load %arg2[%c0_51, %c1_52, %c4_53, %c0_54] : memref<1x3x85x256xf32, #tpu.memory_space<vmem>>, vector<1x1x81x256xf32>
    %88 = vector.shape_cast %87 : vector<1x1x81x256xf32> to vector<81x256xf32>
    %89 = arith.negf %88 : vector<81x256xf32>
    %90 = math.exp %89 : vector<81x256xf32>
    %cst_55 = arith.constant 1.000000e+00 : f32
    %91 = vector.broadcast %cst_55 : f32 to vector<81x256xf32>
    %92 = arith.addf %91, %90 : vector<81x256xf32>
    %93 = arith.divf %91, %92 : vector<81x256xf32>
    %94 = vector.extract_strided_slice %93 {offsets = [1, 0], sizes = [80, 256], strides = [1, 1]} : vector<81x256xf32> to vector<80x256xf32>
    %95 = vector.extract_strided_slice %93 {offsets = [0, 0], sizes = [1, 256], strides = [1, 1]} : vector<81x256xf32> to vector<1x256xf32>
    %96 = vector.broadcast %95 : vector<1x256xf32> to vector<80x256xf32>
    %97 = arith.mulf %94, %96 : vector<80x256xf32>
    %98 = arith.truncf %97 : vector<80x256xf32> to vector<80x256xbf16>
    %c0_56 = arith.constant 0 : index
    %c1_57 = arith.constant 1 : index
    %c0_58 = arith.constant 0 : index
    %c0_59 = arith.constant 0 : index
    %99 = vector.load %arg4[%c0_56, %c1_57, %c0_58, %c0_59] : memref<1x3x80x256xbf16, #tpu.memory_space<vmem>>, vector<1x1x80x256xbf16>
    %100 = vector.shape_cast %99 : vector<1x1x80x256xbf16> to vector<80x256xbf16>
    %101 = vector.shape_cast %98 : vector<80x256xbf16> to vector<1x1x80x256xbf16>
    tpu.vector_store %arg4[%c0_56, %c1_57, %c0_58, %c0_59], %101 {strides = array<i32>} : memref<1x3x80x256xbf16, #tpu.memory_space<vmem>>, vector<1x1x80x256xbf16>,
    %c0_60 = arith.constant 0 : index
    %c2_61 = arith.constant 2 : index
    %c0_62 = arith.constant 0 : index
    %c0_63 = arith.constant 0 : index
    %102 = vector.load %arg2[%c0_60, %c2_61, %c0_62, %c0_63] : memref<1x3x85x256xf32, #tpu.memory_space<vmem>>, vector<1x1x2x256xf32>
    %103 = vector.shape_cast %102 : vector<1x1x2x256xf32> to vector<2x256xf32>
    %104 = arith.negf %103 : vector<2x256xf32>
    %105 = math.exp %104 : vector<2x256xf32>
    %cst_64 = arith.constant 1.000000e+00 : f32
    %106 = vector.broadcast %cst_64 : f32 to vector<2x256xf32>
    %107 = arith.addf %106, %105 : vector<2x256xf32>
    %108 = arith.divf %106, %107 : vector<2x256xf32>
    %109 = arith.mulf %108, %27 : vector<2x256xf32>
    %110 = arith.addf %109, %24 : vector<2x256xf32>
    %cst_65 = arith.constant 3.125000e-01 : f32
    %cst_66 = arith.constant 2.187500e-01 : f32
    %111 = vector.broadcast %cst_65 : f32 to vector<2x256xf32>
    %112 = vector.broadcast %cst_66 : f32 to vector<2x256xf32>
    %113 = arith.select %3, %111, %112 : vector<2x256xi1>, vector<2x256xf32>
    %c0_67 = arith.constant 0 : index
    %c2_68 = arith.constant 2 : index
    %c2_69 = arith.constant 2 : index
    %c0_70 = arith.constant 0 : index
    %114 = vector.load %arg2[%c0_67, %c2_68, %c2_69, %c0_70] : memref<1x3x85x256xf32, #tpu.memory_space<vmem>>, vector<1x1x2x256xf32>
    %115 = vector.shape_cast %114 : vector<1x1x2x256xf32> to vector<2x256xf32>
    %116 = math.exp %115 : vector<2x256xf32>
    %117 = arith.mulf %116, %113 : vector<2x256xf32>
    %c0_71 = arith.constant 0 : index
    %c2_72 = arith.constant 2 : index
    %c0_73 = arith.constant 0 : index
    %c0_74 = arith.constant 0 : index
    %118 = vector.load %arg3[%c0_71, %c2_72, %c0_73, %c0_74] : memref<1x3x4x256xf32, #tpu.memory_space<vmem>>, vector<1x1x2x256xf32>
    %119 = vector.shape_cast %118 : vector<1x1x2x256xf32> to vector<2x256xf32>
    %120 = vector.shape_cast %110 : vector<2x256xf32> to vector<1x1x2x256xf32>
    tpu.vector_store %arg3[%c0_71, %c2_72, %c0_73, %c0_74], %120 {strides = array<i32>} : memref<1x3x4x256xf32, #tpu.memory_space<vmem>>, vector<1x1x2x256xf32>,
    %c0_75 = arith.constant 0 : index
    %c2_76 = arith.constant 2 : index
    %c2_77 = arith.constant 2 : index
    %c0_78 = arith.constant 0 : index
    %121 = vector.load %arg3[%c0_75, %c2_76, %c2_77, %c0_78] : memref<1x3x4x256xf32, #tpu.memory_space<vmem>>, vector<1x1x2x256xf32>
    %122 = vector.shape_cast %121 : vector<1x1x2x256xf32> to vector<2x256xf32>
    %123 = vector.shape_cast %117 : vector<2x256xf32> to vector<1x1x2x256xf32>
    tpu.vector_store %arg3[%c0_75, %c2_76, %c2_77, %c0_78], %123 {strides = array<i32>} : memref<1x3x4x256xf32, #tpu.memory_space<vmem>>, vector<1x1x2x256xf32>,
    %c0_79 = arith.constant 0 : index
    %c2_80 = arith.constant 2 : index
    %c4_81 = arith.constant 4 : index
    %c0_82 = arith.constant 0 : index
    %124 = vector.load %arg2[%c0_79, %c2_80, %c4_81, %c0_82] : memref<1x3x85x256xf32, #tpu.memory_space<vmem>>, vector<1x1x81x256xf32>
    %125 = vector.shape_cast %124 : vector<1x1x81x256xf32> to vector<81x256xf32>
    %126 = arith.negf %125 : vector<81x256xf32>
    %127 = math.exp %126 : vector<81x256xf32>
    %cst_83 = arith.constant 1.000000e+00 : f32
    %128 = vector.broadcast %cst_83 : f32 to vector<81x256xf32>
    %129 = arith.addf %128, %127 : vector<81x256xf32>
    %130 = arith.divf %128, %129 : vector<81x256xf32>
    %131 = vector.extract_strided_slice %130 {offsets = [1, 0], sizes = [80, 256], strides = [1, 1]} : vector<81x256xf32> to vector<80x256xf32>
    %132 = vector.extract_strided_slice %130 {offsets = [0, 0], sizes = [1, 256], strides = [1, 1]} : vector<81x256xf32> to vector<1x256xf32>
    %133 = vector.broadcast %132 : vector<1x256xf32> to vector<80x256xf32>
    %134 = arith.mulf %131, %133 : vector<80x256xf32>
    %135 = arith.truncf %134 : vector<80x256xf32> to vector<80x256xbf16>
    %c0_84 = arith.constant 0 : index
    %c2_85 = arith.constant 2 : index
    %c0_86 = arith.constant 0 : index
    %c0_87 = arith.constant 0 : index
    %136 = vector.load %arg4[%c0_84, %c2_85, %c0_86, %c0_87] : memref<1x3x80x256xbf16, #tpu.memory_space<vmem>>, vector<1x1x80x256xbf16>
    %137 = vector.shape_cast %136 : vector<1x1x80x256xbf16> to vector<80x256xbf16>
    %138 = vector.shape_cast %135 : vector<80x256xbf16> to vector<1x1x80x256xbf16>
    tpu.vector_store %arg4[%c0_84, %c2_85, %c0_86, %c0_87], %138 {strides = array<i32>} : memref<1x3x80x256xbf16, #tpu.memory_space<vmem>>, vector<1x1x80x256xbf16>,
    return
  }
  func.func @transform_0(%arg0: i32, %arg1: i32) -> (i32, i32, i32, i32) {
    %c0_i32 = arith.constant 0 : i32
    %c0_i32_0 = arith.constant 0 : i32
    %c0_i32_1 = arith.constant 0 : i32
    return %arg0, %c0_i32, %c0_i32_0, %arg1 : i32, i32, i32, i32
  }
  func.func @transform_1(%arg0: i32, %arg1: i32) -> (i32, i32, i32, i32) {
    %c0_i32 = arith.constant 0 : i32
    %c0_i32_0 = arith.constant 0 : i32
    %c0_i32_1 = arith.constant 0 : i32
    return %arg0, %c0_i32, %c0_i32_0, %arg1 : i32, i32, i32, i32
  }
  func.func @transform_2(%arg0: i32, %arg1: i32) -> (i32, i32, i32, i32) {
    %c0_i32 = arith.constant 0 : i32
    %c0_i32_0 = arith.constant 0 : i32
    %c0_i32_1 = arith.constant 0 : i32
    return %arg0, %c0_i32, %c0_i32_0, %arg1 : i32, i32, i32, i32
  }
}

</mosaic_0001>

<llo_original>
// kernel: tpu_custom_call.1
$region0: #{tpu_custom_call.1}
  #allocation0 [shape = 'u32[]', space=smem, size = 0x4, offset = 0x4, fixed_abs, tag = 'smem constant byte address 0x4 - core index']
  #allocation1 [shape = 'u32[144,128]{1,0:T(1,128)}', space=vmem, size = 0x12000, scoped, tag = 'internal scratch']
  %s0 = inlined_call_operand.vmem [shape: f32[2,3,85,256], index: 0, kind: input, shape index: {}]
  %s1 = inlined_call_operand.hbm [shape: f32[2,3,4,256], index: 1, kind: output, shape index: {0}]
  %s2 = inlined_call_operand.hbm [shape: bf16[2,3,80,256], index: 2, kind: output, shape index: {1}]
  %3 = xla_tuple %s1, %s2
  %s4 = sld [smem:[#allocation0]]
  $region45: #{tpu_custom_call.1} parent=0
    _
  %s6 = ssub.s32 1, %s4
  %s7 = scalar_select 0, %s6, %s4
  $region1: #{tpu_custom_call.1} parent=0
    #allocation2 [shape = 'u8[24576]{0}', space=vmem, size = 0x6000, scoped, tag = 'output window, operand 0']
    #allocation3 [shape = 's32[2]{0}', space=sflag, size = 0x8, scoped, tag = 'scoped memory for tpu_custom_call.1']
    #allocation4 [shape = 'u8[245760]{0}', space=vmem, size = 0x3c000, scoped, tag = 'output window, operand 1']
    #allocation5 [shape = 's32[2]{0}', space=sflag, size = 0x8, scoped, tag = 'scoped memory for tpu_custom_call.1']
    %8 = vsyncpa [#allocation3], 0
    %s9 = scalar_lea.sflag [#allocation3], 1
    %10 = vsyncpa %s9, 0
    %11 = vsyncpa [#allocation5], 0
    %s12 = scalar_lea.sflag [#allocation5], 1
    %13 = vsyncpa %s12, 0
    loop: start=0, step=1, limit=4
    $region2: #{tpu_custom_call.1} parent=1 // loop_pre_header
      _
    $region3: #{tpu_custom_call.1} parent=1 // loop_header
      %s15 = sphi 0, %s19
      %p16 = scmp.ge.s32.totalorder %s15, 4
      %s22 = sphi 0, %s34
      %s23 = sphi 0, %s30
      %s24 = sphi 0, %s22
      %s25 = sphi 0, %s23
      %s26 = sphi 0, %s24
      %s27 = sphi 0, %s25
      %s39 = sphi 0, %s41
      %s42 = sphi 0, %s39
      %s43 = sphi 0, %s42
      %s59 = sphi 0, %s43
      %s67 = sphi 0, %s69
      %s70 = sphi 0, %s67
      %s71 = sphi 0, %s70
      %s87 = sphi 0, %s71
      %s95 = sphi 0, %s97
      %s98 = sphi 0, %s95
      %s99 = sphi 0, %s98
      %s115 = sphi 0, %s99
    $region4: #{tpu_custom_call.1} parent=1 // loop_header_branch
      %18 = sbr.rel (%p16) target = $region8
    $region5: #{tpu_custom_call.1} parent=1 // loop_body
      %s20 = ssub.s32 %s15, 1
      %s21 = ssub.s32 %s15, 2
      %s28 = sadd.s32 1, %s23
      %p29 = scmp.ge.s32.totalorder %s28, 1
      %s30 = scalar_select %p29, 0, %s28
      %s31 = sadd.s32 1, %s22
      %s32 = scalar_select %p29, %s31, %s22
      %p33 = scmp.ge.s32.totalorder %s32, 2
      %s34 = scalar_select %p33, 0, %s32
      %s35 = ssub.s32 %s22, %s34
      %s36 = ssub.s32 %s23, %s30
      %s37 = sor.u32 %s35, %s36
      %p38 = scmp.eq.s32.totalorder %s37, 0
      %s40 = sadd.s32 %s39, 1
      %s41 = scalar_select %p38, %s39, %s40
      %p44 = pneg %p38
      %p45 = scmp.eq.s32.totalorder %s15, 1
      %p46 = por %p44, %p45
      %p47 = scmp.ne.s32.totalorder %s39, %s42
      %p48 = scmp.eq.s32.totalorder %s15, 0
      %p49 = por %p47, %p48
      %p50 = scmp.ne.s32.totalorder %s39, %s42
      %p51 = scmp.eq.s32.totalorder %s20, 1
      %p52 = por %p50, %p51
      %p53 = scmp.ne.s32.totalorder %s42, %s43
      %p54 = scmp.eq.s32.totalorder %s20, 0
      %p55 = por %p53, %p54
      %p56 = scmp.ne.s32.totalorder %s42, %s43
      %p57 = scmp.eq.s32.totalorder %s21, 1
      %p58 = por %p56, %p57
      %p60 = scmp.ne.s32.totalorder %s43, %s59
      %p61 = scmp.eq.s32.totalorder %s21, 0
      %p62 = por %p60, %p61
      %s63 = ssub.s32 %s22, %s34
      %s64 = ssub.s32 %s23, %s30
      %s65 = sor.u32 %s63, %s64
      %p66 = scmp.eq.s32.totalorder %s65, 0
      %s68 = sadd.s32 %s67, 1
      %s69 = scalar_select %p66, %s67, %s68
      %p72 = pneg %p66
      %p73 = scmp.eq.s32.totalorder %s15, 1
      %p74 = por %p72, %p73
      %p75 = scmp.ne.s32.totalorder %s67, %s70
      %p76 = scmp.eq.s32.totalorder %s15, 0
      %p77 = por %p75, %p76
      %p78 = scmp.ne.s32.totalorder %s67, %s70
      %p79 = scmp.eq.s32.totalorder %s20, 1
      %p80 = por %p78, %p79
      %p81 = scmp.ne.s32.totalorder %s70, %s71
      %p82 = scmp.eq.s32.totalorder %s20, 0
      %p83 = por %p81, %p82
      %p84 = scmp.ne.s32.totalorder %s70, %s71
      %p85 = scmp.eq.s32.totalorder %s21, 1
      %p86 = por %p84, %p85
      %p88 = scmp.ne.s32.totalorder %s71, %s87
      %p89 = scmp.eq.s32.totalorder %s21, 0
      %p90 = por %p88, %p89
      %s91 = ssub.s32 %s22, %s34
      %s92 = ssub.s32 %s23, %s30
      %s93 = sor.u32 %s91, %s92
      %p94 = scmp.eq.s32.totalorder %s93, 0
      %s96 = sadd.s32 %s95, 1
      %s97 = scalar_select %p94, %s95, %s96
      %p100 = pneg %p94
      %p101 = scmp.eq.s32.totalorder %s15, 1
      %p102 = por %p100, %p101
      %p103 = scmp.ne.s32.totalorder %s95, %s98
      %p104 = scmp.eq.s32.totalorder %s15, 0
      %p105 = por %p103, %p104
      %p106 = scmp.ne.s32.totalorder %s95, %s98
      %p107 = scmp.eq.s32.totalorder %s20, 1
      %p108 = por %p106, %p107
      %p109 = scmp.ne.s32.totalorder %s98, %s99
      %p110 = scmp.eq.s32.totalorder %s20, 0
      %p111 = por %p109, %p110
      %p112 = scmp.ne.s32.totalorder %s98, %s99
      %p113 = scmp.eq.s32.totalorder %s21, 1
      %p114 = por %p112, %p113
      %p116 = scmp.ne.s32.totalorder %s99, %s115
      %p117 = scmp.eq.s32.totalorder %s21, 0
      %p118 = por %p116, %p117
      %p119 = scmp.le.s32.totalorder 1, %s15
      %p120 = scmp.lt.s32.totalorder %s15, 3
      %p121 = pnand %p119, %p120
      %p122 = pneg %p121
      // Predicated region
      $region9: #{tpu_custom_call.1} parent=5 // pred_check
        _
      $region10: #{tpu_custom_call.1} parent=5 // pred_check_branch
        %124 = sbr.rel (%p121) target = $region12
      $region11: #{tpu_custom_call.1} parent=5 // pred_region
        %s125 = ssub.s32 %s15, 1
      $region12: #{tpu_custom_call.1} parent=5 // pred_fallthru
        _
      %p126 = scmp.lt.s32.totalorder %s15, 2
      // Predicated region
      $region13: #{tpu_custom_call.1} parent=5 // pred_check
        %p127 = pneg %p126
      $region14: #{tpu_custom_call.1} parent=5 // pred_check_branch
        %129 = sbr.rel (%p127) target = $region16
      $region15: #{tpu_custom_call.1} parent=5 // pred_region
        // Predicated region
        $region17: #{tpu_custom_call.1} parent=15 // pred_check
          %p130 = pneg %p49
        $region18: #{tpu_custom_call.1} parent=15 // pred_check_branch
          %132 = sbr.rel (%p130) target = $region20
        $region19: #{tpu_custom_call.1} parent=15 // pred_region
          %s133 = smul.u32 2, %s23
          %p134 = scmp.lt.s32.totalorder %s22, 1
          %s135 = scalar_select %p134, %s22, 1
          %p136 = scmp.lt.s32.totalorder %s133, 1
          %s137 = scalar_select %p136, %s133, 1
          %s138 = smul.addr %s135, 66
          %s139 = sadd.s32 %s137, %s138
          %s140 = smul.addr %s139, 8
          %s141 = scalar_lea.vmem %s0, %s140
          %s142 = smul.u32 2, %s23
        $region20: #{tpu_custom_call.1} parent=15 // pred_fallthru
          _
      $region16: #{tpu_custom_call.1} parent=5 // pred_fallthru
        _
      %p143 = scmp.le.s32.totalorder 1, %s15
      %p144 = scmp.lt.s32.totalorder %s15, 3
      %p145 = pnand %p143, %p144
      %p146 = pneg %p145
      // Predicated region
      $region21: #{tpu_custom_call.1} parent=5 // pred_check
        _
      $region22: #{tpu_custom_call.1} parent=5 // pred_check_branch
        %148 = sbr.rel (%p145) target = $region24
      $region23: #{tpu_custom_call.1} parent=5 // pred_region
        %s149 = ssub.s32 %s15, 1
        %s150 = smul.u32 2, %s25
        %p151 = scmp.lt.s32.totalorder %s24, 1
        %s152 = scalar_select %p151, %s24, 1
        %p153 = scmp.lt.s32.totalorder %s150, 1
        %s154 = scalar_select %p153, %s150, 1
        %s155 = smul.addr %s152, 66
        %s156 = sadd.s32 %s154, %s155
        %s157 = smul.addr %s156, 8
        %s158 = scalar_lea.vmem %s0, %s157
        %p159 = pneg %p55
        %p160 = pneg %p52
        %p161 = pneg %p83
        %p162 = pneg %p80
        %s163 = sand.u32 %s70, 1
        %s164 = scalar_lea.sflag [#allocation3], %s163
        %s165 = sand.u32 %s70, 1
        %s166 = smul.addr %s165, 24
        %s167 = scalar_lea.vmem [#allocation2], %s166
        %p168 = pneg %p111
        %p169 = pneg %p108
        %s170 = sand.u32 %s98, 1
        %s171 = scalar_lea.sflag [#allocation5], %s170
        %s172 = sand.u32 %s98, 1
        %s173 = smul.addr %s172, 240
        %s174 = scalar_lea.vmem [#allocation4], %s173
        %s175 = smul.u32 2, %s25
        %p176 = scmp.lt.s32.totalorder %s24, 1
        %s177 = scalar_select %p176, %s24, 1
        %p178 = scmp.lt.s32.totalorder %s175, 1
        %s179 = scalar_select %p178, %s175, 1
        %s180 = smul.addr %s177, 66
        %s181 = sadd.s32 %s179, %s180
        %s182 = smul.addr %s181, 8
        %s183 = scalar_lea.vmem %s0, %s182
        %s184 = smul.u32 2, %s25
        %s185 = smul.u32 2, %s25
        %s186 = smul.u32 2, %s25
        %v187 = vlaneseq
        %v188 = vshrl.u32 %v187, 7
        %v189 = vlaneseq
        %v190 = vand.u32 %v189, 127
        %v191 = vadd.s32 %v190, 128
        %vm192 = vcmp.eq.s32.totalorder %v188, 0
        %s193 = smul.u32 %s25, 256
        %v194 = vstv %s193
        %v195 = vadd.s32 %v190, %v194
        %v196 = vadd.s32 %v191, %v194
        %v197 = vcvt.s32.f32 %v195
        %v198 = vcvt.s32.f32 %v196
        %v199 = vadd.f32 %v197, 0.5
        %v200 = vadd.f32 %v198, 0.5
        %v201 = vmul.f32 %v199, 0.0625
        %v202 = vmul.f32 %v200, 0.0625
        %v203 = vfloor.f32 %v201
        %v204 = vfloor.f32 %v202
        %v205 = vmul.f32 %v203, 16.0
        %v206 = vmul.f32 %v204, 16.0
        %v207 = vsub.f32 %v197, %v205
        %v208 = vsub.f32 %v198, %v206
        %v209 = vsub.f32 %v207, 0.025
        %v210 = vsub.f32 %v208, 0.025
        %v211 = vmul.f32 %v209, 0.0625
        %v212 = vmul.f32 %v210, 0.0625
        %v213 = vsub.f32 %v203, 0.025
        %v214 = vsub.f32 %v204, 0.025
        %v215 = vmul.f32 %v213, 0.0625
        %v216 = vmul.f32 %v214, 0.0625
        %v217 = vsel %vm192, %v211, %v215
        %v218 = vsel %vm192, %v212, %v216
        %v219 = vld [vmem:[%s183] sm:$0x3]
        %v220 = vld [vmem:[%s183 + $0x8] sm:$0x3]
        %v221 = vxor.u32 %v219, 2147483648
        %v222 = vxor.u32 %v220, 2147483648
        %v223 = vmul.f32 %v221, 1.442695
        %v224 = vpow.pop %v223
        %v225 = vmul.f32 %v222, 1.442695
        %v226 = vpow.pop %v225
        %v227 = vadd.f32 %v224, 1.0
        %v228 = vadd.f32 %v226, 1.0
        %v229 = vrcp.pop %v227
        %v230 = vmul.f32 1.0, %v229
        %v231 = vrcp.pop %v228
        %v232 = vmul.f32 1.0, %v231
        %v233 = vmul.f32 %v230, 0.065625
        %v234 = vmul.f32 %v232, 0.065625
        %v235 = vadd.f32 %v233, %v217
        %v236 = vadd.f32 %v234, %v218
        %v237 = vsel %vm192, 0.09375, 0.125
        %v238 = vld [vmem:[%s183] sm:$0xc]
        %v239 = vld [vmem:[%s183 + $0x8] sm:$0xc]
        %v240 = vmul.f32 %v238, 1.442695
        %v241 = vpow.pop %v240
        %v242 = vmul.f32 %v239, 1.442695
        %v243 = vpow.pop %v242
        %v245 = vrot.slane %v237, 6
        %v247 = vmul.f32 %v241, %v245
        %v248 = vmul.f32 %v243, %v245
        %v251 = vcombine.low %v235, %v236
        %253 = vst [vmem:[%s167] sm:$0x33] %v251
        %v256 = vcombine.low %v247, %v248
        %258 = vst [vmem:[%s167] sm:$0xcc] %v256
        %v259 = vld [vmem:[%s183] sm:$0xf0]
        %v260 = vld [vmem:[%s183 + $0x8] sm:$0xf0]
        %v261 = vld [vmem:[%s183 + $0x10] sm:$0xff]
        %v262 = vld [vmem:[%s183 + $0x18] sm:$0xff]
        %v263 = vld [vmem:[%s183 + $0x20] sm:$0xff]
        %v264 = vld [vmem:[%s183 + $0x28] sm:$0xff]
        %v265 = vld [vmem:[%s183 + $0x30] sm:$0xff]
        %v266 = vld [vmem:[%s183 + $0x38] sm:$0xff]
        %v267 = vld [vmem:[%s183 + $0x40] sm:$0xff]
        %v268 = vld [vmem:[%s183 + $0x48] sm:$0xff]
        %v269 = vld [vmem:[%s183 + $0x50] sm:$0xff]
        %v270 = vld [vmem:[%s183 + $0x58] sm:$0xff]
        %v271 = vld [vmem:[%s183 + $0x60] sm:$0xff]
        %v272 = vld [vmem:[%s183 + $0x68] sm:$0xff]
        %v273 = vld [vmem:[%s183 + $0x70] sm:$0xff]
        %v274 = vld [vmem:[%s183 + $0x78] sm:$0xff]
        %v275 = vld [vmem:[%s183 + $0x80] sm:$0xff]
        %v276 = vld [vmem:[%s183 + $0x88] sm:$0xff]
        %v277 = vld [vmem:[%s183 + $0x90] sm:$0xff]
        %v278 = vld [vmem:[%s183 + $0x98] sm:$0xff]
        %v279 = vld [vmem:[%s183 + $0xa0] sm:$0x1f]
        %v280 = vld [vmem:[%s183 + $0xa8] sm:$0x1f]
        %v281 = vxor.u32 %v259, 2147483648
        %v282 = vxor.u32 %v260, 2147483648
        %v283 = vxor.u32 %v261, 2147483648
        %v284 = vxor.u32 %v262, 2147483648
        %v285 = vxor.u32 %v263, 2147483648
        %v286 = vxor.u32 %v264, 2147483648
        %v287 = vxor.u32 %v265, 2147483648
        %v288 = vxor.u32 %v266, 2147483648
        %v289 = vxor.u32 %v267, 2147483648
        %v290 = vxor.u32 %v268, 2147483648
        %v291 = vxor.u32 %v269, 2147483648
        %v292 = vxor.u32 %v270, 2147483648
        %v293 = vxor.u32 %v271, 2147483648
        %v294 = vxor.u32 %v272, 2147483648
        %v295 = vxor.u32 %v273, 2147483648
        %v296 = vxor.u32 %v274, 2147483648
        %v297 = vxor.u32 %v275, 2147483648
        %v298 = vxor.u32 %v276, 2147483648
        %v299 = vxor.u32 %v277, 2147483648
        %v300 = vxor.u32 %v278, 2147483648
        %v301 = vxor.u32 %v279, 2147483648
        %v302 = vxor.u32 %v280, 2147483648
        %v303 = vmul.f32 %v281, 1.442695
        %v304 = vpow.pop %v303
        %v305 = vmul.f32 %v282, 1.442695
        %v306 = vpow.pop %v305
        %v307 = vmul.f32 %v283, 1.442695
        %v308 = vpow.pop %v307
        %v309 = vmul.f32 %v284, 1.442695
        %v310 = vpow.pop %v309
        %v311 = vmul.f32 %v285, 1.442695
        %v312 = vpow.pop %v311
        %v313 = vmul.f32 %v286, 1.442695
        %v314 = vpow.pop %v313
        %v315 = vmul.f32 %v287, 1.442695
        %v316 = vpow.pop %v315
        %v317 = vmul.f32 %v288, 1.442695
        %v318 = vpow.pop %v317
        %v319 = vmul.f32 %v289, 1.442695
        %v320 = vpow.pop %v319
        %v321 = vmul.f32 %v290, 1.442695
        %v322 = vpow.pop %v321
        %v323 = vmul.f32 %v291, 1.442695
        %v324 = vpow.pop %v323
        %v325 = vmul.f32 %v292, 1.442695
        %v326 = vpow.pop %v325
        %v327 = vmul.f32 %v293, 1.442695
        %v328 = vpow.pop %v327
        %v329 = vmul.f32 %v294, 1.442695
        %v330 = vpow.pop %v329
        %v331 = vmul.f32 %v295, 1.442695
        %v332 = vpow.pop %v331
        %v333 = vmul.f32 %v296, 1.442695
        %v334 = vpow.pop %v333
        %v335 = vmul.f32 %v297, 1.442695
        %v336 = vpow.pop %v335
        %v337 = vmul.f32 %v298, 1.442695
        %v338 = vpow.pop %v337
        %v339 = vmul.f32 %v299, 1.442695
        %v340 = vpow.pop %v339
        %v341 = vmul.f32 %v300, 1.442695
        %v342 = vpow.pop %v341
        %v343 = vmul.f32 %v301, 1.442695
        %v344 = vpow.pop %v343
        %v345 = vmul.f32 %v302, 1.442695
        %v346 = vpow.pop %v345
        %v347 = vadd.f32 %v304, 1.0
        %v348 = vadd.f32 %v306, 1.0
        %v349 = vadd.f32 %v308, 1.0
        %v350 = vadd.f32 %v310, 1.0
        %v351 = vadd.f32 %v312, 1.0
        %v352 = vadd.f32 %v314, 1.0
        %v353 = vadd.f32 %v316, 1.0
        %v354 = vadd.f32 %v318, 1.0
        %v355 = vadd.f32 %v320, 1.0
        %v356 = vadd.f32 %v322, 1.0
        %v357 = vadd.f32 %v324, 1.0
        %v358 = vadd.f32 %v326, 1.0
        %v359 = vadd.f32 %v328, 1.0
        %v360 = vadd.f32 %v330, 1.0
        %v361 = vadd.f32 %v332, 1.0
        %v362 = vadd.f32 %v334, 1.0
        %v363 = vadd.f32 %v336, 1.0
        %v364 = vadd.f32 %v338, 1.0
        %v365 = vadd.f32 %v340, 1.0
        %v366 = vadd.f32 %v342, 1.0
        %v367 = vadd.f32 %v344, 1.0
        %v368 = vadd.f32 %v346, 1.0
        %v369 = vrcp.pop %v347
        %v370 = vmul.f32 1.0, %v369
        %v371 = vrcp.pop %v348
        %v372 = vmul.f32 1.0, %v371
        %v373 = vrcp.pop %v349
        %v374 = vmul.f32 1.0, %v373
        %v375 = vrcp.pop %v350
        %v376 = vmul.f32 1.0, %v375
        %v377 = vrcp.pop %v351
        %v378 = vmul.f32 1.0, %v377
        %v379 = vrcp.pop %v352
        %v380 = vmul.f32 1.0, %v379
        %v381 = vrcp.pop %v353
        %v382 = vmul.f32 1.0, %v381
        %v383 = vrcp.pop %v354
        %v384 = vmul.f32 1.0, %v383
        %v385 = vrcp.pop %v355
        %v386 = vmul.f32 1.0, %v385
        %v387 = vrcp.pop %v356
        %v388 = vmul.f32 1.0, %v387
        %v389 = vrcp.pop %v357
        %v390 = vmul.f32 1.0, %v389
        %v391 = vrcp.pop %v358
        %v392 = vmul.f32 1.0, %v391
        %v393 = vrcp.pop %v359
        %v394 = vmul.f32 1.0, %v393
        %v395 = vrcp.pop %v360
        %v396 = vmul.f32 1.0, %v395
        %v397 = vrcp.pop %v361
        %v398 = vmul.f32 1.0, %v397
        %v399 = vrcp.pop %v362
        %v400 = vmul.f32 1.0, %v399
        %v401 = vrcp.pop %v363
        %v402 = vmul.f32 1.0, %v401
        %v403 = vrcp.pop %v364
        %v404 = vmul.f32 1.0, %v403
        %v405 = vrcp.pop %v365
        %v406 = vmul.f32 1.0, %v405
        %v407 = vrcp.pop %v366
        %v408 = vmul.f32 1.0, %v407
        %v409 = vrcp.pop %v367
        %v410 = vmul.f32 1.0, %v409
        %v411 = vrcp.pop %v368
        %v412 = vmul.f32 1.0, %v411
        %v413 = vlaneseq
        %v414 = vshrl.u32 %v413, 7
        %v415 = vsub.s32 4, %v414
        %v416 = vrot.slane %v370, %v415
        %v417 = vlaneseq
        %v418 = vshrl.u32 %v417, 7
        %v419 = vsub.s32 4, %v418
        %v420 = vrot.slane %v372, %v419
        %v421 = vmul.f32 %v370, %v416
        %v422 = vmul.f32 %v372, %v420
        %v423 = vmul.f32 %v374, %v416
        %v424 = vmul.f32 %v376, %v420
        %v425 = vmul.f32 %v378, %v416
        %v426 = vmul.f32 %v380, %v420
        %v427 = vmul.f32 %v382, %v416
        %v428 = vmul.f32 %v384, %v420
        %v429 = vmul.f32 %v386, %v416
        %v430 = vmul.f32 %v388, %v420
        %v431 = vmul.f32 %v390, %v416
        %v432 = vmul.f32 %v392, %v420
        %v433 = vmul.f32 %v394, %v416
        %v434 = vmul.f32 %v396, %v420
        %v435 = vmul.f32 %v398, %v416
        %v436 = vmul.f32 %v400, %v420
        %v437 = vmul.f32 %v402, %v416
        %v438 = vmul.f32 %v404, %v420
        %v439 = vmul.f32 %v406, %v416
        %v440 = vmul.f32 %v408, %v420
        %v441 = vmul.f32 %v410, %v416
        %v442 = vmul.f32 %v412, %v420
        %v443 = vpack.c.bf16 %v423, %v421
        %v444 = vpack.c.bf16 %v424, %v422
        %v445 = vpack.c.bf16 %v427, %v425
        %v446 = vpack.c.bf16 %v428, %v426
        %v447 = vpack.c.bf16 %v431, %v429
        %v448 = vpack.c.bf16 %v432, %v430
        %v449 = vpack.c.bf16 %v435, %v433
        %v450 = vpack.c.bf16 %v436, %v434
        %v451 = vpack.c.bf16 %v439, %v437
        %v452 = vpack.c.bf16 %v440, %v438
        %v453 = vpack.c.bf16 %v441, %v441
        %v454 = vpack.c.bf16 %v442, %v442
        %v467 = vunpack.c.l.b16 %v443
        %v468 = vunpack.c.l.b16 %v444
        %v469 = vunpack.c.h.b16 %v443
        %v470 = vunpack.c.h.b16 %v444
        %v471 = vunpack.c.l.b16 %v445
        %v472 = vunpack.c.l.b16 %v446
        %v473 = vunpack.c.h.b16 %v445
        %v474 = vunpack.c.h.b16 %v446
        %v475 = vunpack.c.l.b16 %v447
        %v476 = vunpack.c.l.b16 %v448
        %v477 = vunpack.c.h.b16 %v447
        %v478 = vunpack.c.h.b16 %v448
        %v479 = vunpack.c.l.b16 %v449
        %v480 = vunpack.c.l.b16 %v450
        %v481 = vunpack.c.h.b16 %v449
        %v482 = vunpack.c.h.b16 %v450
        %v483 = vunpack.c.l.b16 %v451
        %v484 = vunpack.c.l.b16 %v452
        %v485 = vunpack.c.h.b16 %v451
        %v486 = vunpack.c.h.b16 %v452
        %v487 = vunpack.c.l.b16 %v453
        %v488 = vunpack.c.l.b16 %v454
        %v489 = vpack.c.b16 %v468, %v467
        %v490 = vpack.c.b16 %v470, %v469
        %v491 = vpack.c.b16 %v472, %v471
        %v492 = vpack.c.b16 %v474, %v473
        %v493 = vpack.c.b16 %v476, %v475
        %v494 = vpack.c.b16 %v478, %v477
        %v495 = vpack.c.b16 %v480, %v479
        %v496 = vpack.c.b16 %v482, %v481
        %v497 = vpack.c.b16 %v484, %v483
        %v498 = vpack.c.b16 %v486, %v485
        %v499 = vpack.c.b16 %v488, %v487
        %vm500 = vsmask.f32 1280
        %vm501 = vsmask.f32 5392
        %vm502 = vmor %vm500, %vm501
        %v504 = vshrl.u32 %v489, 16
        %v506 = vrot.slane %v504, 6
        %v507 = vshll.u32 %v489, 16
        %v509 = vrot.slane %v507, 7
        %v510 = vor.u32 %v506, %v509
        %v511 = vrot.slane %v510, 4
        %v513 = vshrl.u32 %v490, 16
        %v515 = vrot.slane %v513, 6
        %v516 = vshll.u32 %v490, 16
        %v518 = vrot.slane %v516, 7
        %v519 = vor.u32 %v515, %v518
        %v520 = vsel %vm502, %v511, %v519
        %v521 = vrot.slane %v519, 4
        %v523 = vshrl.u32 %v491, 16
        %v525 = vrot.slane %v523, 6
        %v526 = vshll.u32 %v491, 16
        %v528 = vrot.slane %v526, 7
        %v529 = vor.u32 %v525, %v528
        %v530 = vsel %vm502, %v521, %v529
        %v531 = vrot.slane %v529, 4
        %v533 = vshrl.u32 %v492, 16
        %v535 = vrot.slane %v533, 6
        %v536 = vshll.u32 %v492, 16
        %v538 = vrot.slane %v536, 7
        %v539 = vor.u32 %v535, %v538
        %v540 = vsel %vm502, %v531, %v539
        %v541 = vrot.slane %v539, 4
        %v543 = vshrl.u32 %v493, 16
        %v545 = vrot.slane %v543, 6
        %v546 = vshll.u32 %v493, 16
        %v548 = vrot.slane %v546, 7
        %v549 = vor.u32 %v545, %v548
        %v550 = vsel %vm502, %v541, %v549
        %v551 = vrot.slane %v549, 4
        %v553 = vshrl.u32 %v494, 16
        %v555 = vrot.slane %v553, 6
        %v556 = vshll.u32 %v494, 16
        %v558 = vrot.slane %v556, 7
        %v559 = vor.u32 %v555, %v558
        %v560 = vsel %vm502, %v551, %v559
        %v561 = vrot.slane %v559, 4
        %v563 = vshrl.u32 %v495, 16
        %v565 = vrot.slane %v563, 6
        %v566 = vshll.u32 %v495, 16
        %v568 = vrot.slane %v566, 7
        %v569 = vor.u32 %v565, %v568
        %v570 = vsel %vm502, %v561, %v569
        %v571 = vrot.slane %v569, 4
        %v573 = vshrl.u32 %v496, 16
        %v575 = vrot.slane %v573, 6
        %v576 = vshll.u32 %v496, 16
        %v578 = vrot.slane %v576, 7
        %v579 = vor.u32 %v575, %v578
        %v580 = vsel %vm502, %v571, %v579
        %v581 = vrot.slane %v579, 4
        %v583 = vshrl.u32 %v497, 16
        %v585 = vrot.slane %v583, 6
        %v586 = vshll.u32 %v497, 16
        %v588 = vrot.slane %v586, 7
        %v589 = vor.u32 %v585, %v588
        %v590 = vsel %vm502, %v581, %v589
        %v591 = vrot.slane %v589, 4
        %v593 = vshrl.u32 %v498, 16
        %v595 = vrot.slane %v593, 6
        %v596 = vshll.u32 %v498, 16
        %v598 = vrot.slane %v596, 7
        %v599 = vor.u32 %v595, %v598
        %v600 = vsel %vm502, %v591, %v599
        %v601 = vrot.slane %v599, 4
        %v603 = vshrl.u32 %v499, 16
        %v605 = vrot.slane %v603, 6
        %v606 = vshll.u32 %v499, 16
        %v608 = vrot.slane %v606, 7
        %v609 = vor.u32 %v605, %v608
        %v610 = vsel %vm502, %v601, %v609
        %621 = vst [vmem:[%s174] sm:$0xff] %v520
        %622 = vst [vmem:[%s174 + $0x8] sm:$0xff] %v530
        %623 = vst [vmem:[%s174 + $0x10] sm:$0xff] %v540
        %624 = vst [vmem:[%s174 + $0x18] sm:$0xff] %v550
        %625 = vst [vmem:[%s174 + $0x20] sm:$0xff] %v560
        %626 = vst [vmem:[%s174 + $0x28] sm:$0xff] %v570
        %627 = vst [vmem:[%s174 + $0x30] sm:$0xff] %v580
        %628 = vst [vmem:[%s174 + $0x38] sm:$0xff] %v590
        %629 = vst [vmem:[%s174 + $0x40] sm:$0xff] %v600
        %630 = vst [vmem:[%s174 + $0x48] sm:$0xff] %v610
        %s631 = scalar_lea.vmem %s183, 176
        %v632 = vld [vmem:[%s631] sm:$0x3]
        %v633 = vld [vmem:[%s631 + $0x8] sm:$0x3]
        %v634 = vxor.u32 %v632, 2147483648
        %v635 = vxor.u32 %v633, 2147483648
        %v636 = vmul.f32 %v634, 1.442695
        %v637 = vpow.pop %v636
        %v638 = vmul.f32 %v635, 1.442695
        %v639 = vpow.pop %v638
        %v640 = vadd.f32 %v637, 1.0
        %v641 = vadd.f32 %v639, 1.0
        %v642 = vrcp.pop %v640
        %v643 = vmul.f32 1.0, %v642
        %v644 = vrcp.pop %v641
        %v645 = vmul.f32 1.0, %v644
        %v646 = vmul.f32 %v643, 0.065625
        %v647 = vmul.f32 %v645, 0.065625
        %v648 = vadd.f32 %v646, %v217
        %v649 = vadd.f32 %v647, %v218
        %v650 = vsel %vm192, 0.1484375, 0.28125
        %v651 = vld [vmem:[%s631] sm:$0xc]
        %v652 = vld [vmem:[%s631 + $0x8] sm:$0xc]
        %v653 = vmul.f32 %v651, 1.442695
        %v654 = vpow.pop %v653
        %v655 = vmul.f32 %v652, 1.442695
        %v656 = vpow.pop %v655
        %v658 = vrot.slane %v650, 6
        %v660 = vmul.f32 %v654, %v658
        %v661 = vmul.f32 %v656, %v658
        %v664 = vcombine.low %v648, %v649
        %s666 = scalar_lea.vmem %s167, 8 [#allocation2]
        %667 = vst [vmem:[%s666] sm:$0x33] %v664
        %v670 = vcombine.low %v660, %v661
        %672 = vst [vmem:[%s666] sm:$0xcc] %v670
        %v673 = vld [vmem:[%s631] sm:$0xf0]
        %v674 = vld [vmem:[%s631 + $0x8] sm:$0xf0]
        %v675 = vld [vmem:[%s631 + $0x10] sm:$0xff]
        %v676 = vld [vmem:[%s631 + $0x18] sm:$0xff]
        %v677 = vld [vmem:[%s631 + $0x20] sm:$0xff]
        %v678 = vld [vmem:[%s631 + $0x28] sm:$0xff]
        %v679 = vld [vmem:[%s631 + $0x30] sm:$0xff]
        %v680 = vld [vmem:[%s631 + $0x38] sm:$0xff]
        %v681 = vld [vmem:[%s631 + $0x40] sm:$0xff]
        %v682 = vld [vmem:[%s631 + $0x48] sm:$0xff]
        %v683 = vld [vmem:[%s631 + $0x50] sm:$0xff]
        %v684 = vld [vmem:[%s631 + $0x58] sm:$0xff]
        %v685 = vld [vmem:[%s631 + $0x60] sm:$0xff]
        %v686 = vld [vmem:[%s631 + $0x68] sm:$0xff]
        %v687 = vld [vmem:[%s631 + $0x70] sm:$0xff]
        %v688 = vld [vmem:[%s631 + $0x78] sm:$0xff]
        %v689 = vld [vmem:[%s631 + $0x80] sm:$0xff]
        %v690 = vld [vmem:[%s631 + $0x88] sm:$0xff]
        %v691 = vld [vmem:[%s631 + $0x90] sm:$0xff]
        %v692 = vld [vmem:[%s631 + $0x98] sm:$0xff]
        %v693 = vld [vmem:[%s631 + $0xa0] sm:$0x1f]
        %v694 = vld [vmem:[%s631 + $0xa8] sm:$0x1f]
        %v695 = vxor.u32 %v673, 2147483648
        %v696 = vxor.u32 %v674, 2147483648
        %v697 = vxor.u32 %v675, 2147483648
        %v698 = vxor.u32 %v676, 2147483648
        %v699 = vxor.u32 %v677, 2147483648
        %v700 = vxor.u32 %v678, 2147483648
        %v701 = vxor.u32 %v679, 2147483648
        %v702 = vxor.u32 %v680, 2147483648
        %v703 = vxor.u32 %v681, 2147483648
        %v704 = vxor.u32 %v682, 2147483648
        %v705 = vxor.u32 %v683, 2147483648
        %v706 = vxor.u32 %v684, 2147483648
        %v707 = vxor.u32 %v685, 2147483648
        %v708 = vxor.u32 %v686, 2147483648
        %v709 = vxor.u32 %v687, 2147483648
        %v710 = vxor.u32 %v688, 2147483648
        %v711 = vxor.u32 %v689, 2147483648
        %v712 = vxor.u32 %v690, 2147483648
        %v713 = vxor.u32 %v691, 2147483648
        %v714 = vxor.u32 %v692, 2147483648
        %v715 = vxor.u32 %v693, 2147483648
        %v716 = vxor.u32 %v694, 2147483648
        %v717 = vmul.f32 %v695, 1.442695
        %v718 = vpow.pop %v717
        %v719 = vmul.f32 %v696, 1.442695
        %v720 = vpow.pop %v719
        %v721 = vmul.f32 %v697, 1.442695
        %v722 = vpow.pop %v721
        %v723 = vmul.f32 %v698, 1.442695
        %v724 = vpow.pop %v723
        %v725 = vmul.f32 %v699, 1.442695
        %v726 = vpow.pop %v725
        %v727 = vmul.f32 %v700, 1.442695
        %v728 = vpow.pop %v727
        %v729 = vmul.f32 %v701, 1.442695
        %v730 = vpow.pop %v729
        %v731 = vmul.f32 %v702, 1.442695
        %v732 = vpow.pop %v731
        %v733 = vmul.f32 %v703, 1.442695
        %v734 = vpow.pop %v733
        %v735 = vmul.f32 %v704, 1.442695
        %v736 = vpow.pop %v735
        %v737 = vmul.f32 %v705, 1.442695
        %v738 = vpow.pop %v737
        %v739 = vmul.f32 %v706, 1.442695
        %v740 = vpow.pop %v739
        %v741 = vmul.f32 %v707, 1.442695
        %v742 = vpow.pop %v741
        %v743 = vmul.f32 %v708, 1.442695
        %v744 = vpow.pop %v743
        %v745 = vmul.f32 %v709, 1.442695
        %v746 = vpow.pop %v745
        %v747 = vmul.f32 %v710, 1.442695
        %v748 = vpow.pop %v747
        %v749 = vmul.f32 %v711, 1.442695
        %v750 = vpow.pop %v749
        %v751 = vmul.f32 %v712, 1.442695
        %v752 = vpow.pop %v751
        %v753 = vmul.f32 %v713, 1.442695
        %v754 = vpow.pop %v753
        %v755 = vmul.f32 %v714, 1.442695
        %v756 = vpow.pop %v755
        %v757 = vmul.f32 %v715, 1.442695
        %v758 = vpow.pop %v757
        %v759 = vmul.f32 %v716, 1.442695
        %v760 = vpow.pop %v759
        %v761 = vadd.f32 %v718, 1.0
        %v762 = vadd.f32 %v720, 1.0
        %v763 = vadd.f32 %v722, 1.0
        %v764 = vadd.f32 %v724, 1.0
        %v765 = vadd.f32 %v726, 1.0
        %v766 = vadd.f32 %v728, 1.0
        %v767 = vadd.f32 %v730, 1.0
        %v768 = vadd.f32 %v732, 1.0
        %v769 = vadd.f32 %v734, 1.0
        %v770 = vadd.f32 %v736, 1.0
        %v771 = vadd.f32 %v738, 1.0
        %v772 = vadd.f32 %v740, 1.0
        %v773 = vadd.f32 %v742, 1.0
        %v774 = vadd.f32 %v744, 1.0
        %v775 = vadd.f32 %v746, 1.0
        %v776 = vadd.f32 %v748, 1.0
        %v777 = vadd.f32 %v750, 1.0
        %v778 = vadd.f32 %v752, 1.0
        %v779 = vadd.f32 %v754, 1.0
        %v780 = vadd.f32 %v756, 1.0
        %v781 = vadd.f32 %v758, 1.0
        %v782 = vadd.f32 %v760, 1.0
        %v783 = vrcp.pop %v761
        %v784 = vmul.f32 1.0, %v783
        %v785 = vrcp.pop %v762
        %v786 = vmul.f32 1.0, %v785
        %v787 = vrcp.pop %v763
        %v788 = vmul.f32 1.0, %v787
        %v789 = vrcp.pop %v764
        %v790 = vmul.f32 1.0, %v789
        %v791 = vrcp.pop %v765
        %v792 = vmul.f32 1.0, %v791
        %v793 = vrcp.pop %v766
        %v794 = vmul.f32 1.0, %v793
        %v795 = vrcp.pop %v767
        %v796 = vmul.f32 1.0, %v795
        %v797 = vrcp.pop %v768
        %v798 = vmul.f32 1.0, %v797
        %v799 = vrcp.pop %v769
        %v800 = vmul.f32 1.0, %v799
        %v801 = vrcp.pop %v770
        %v802 = vmul.f32 1.0, %v801
        %v803 = vrcp.pop %v771
        %v804 = vmul.f32 1.0, %v803
        %v805 = vrcp.pop %v772
        %v806 = vmul.f32 1.0, %v805
        %v807 = vrcp.pop %v773
        %v808 = vmul.f32 1.0, %v807
        %v809 = vrcp.pop %v774
        %v810 = vmul.f32 1.0, %v809
        %v811 = vrcp.pop %v775
        %v812 = vmul.f32 1.0, %v811
        %v813 = vrcp.pop %v776
        %v814 = vmul.f32 1.0, %v813
        %v815 = vrcp.pop %v777
        %v816 = vmul.f32 1.0, %v815
        %v817 = vrcp.pop %v778
        %v818 = vmul.f32 1.0, %v817
        %v819 = vrcp.pop %v779
        %v820 = vmul.f32 1.0, %v819
        %v821 = vrcp.pop %v780
        %v822 = vmul.f32 1.0, %v821
        %v823 = vrcp.pop %v781
        %v824 = vmul.f32 1.0, %v823
        %v825 = vrcp.pop %v782
        %v826 = vmul.f32 1.0, %v825
        %v827 = vlaneseq
        %v828 = vshrl.u32 %v827, 7
        %v829 = vsub.s32 4, %v828
        %v830 = vrot.slane %v784, %v829
        %v831 = vlaneseq
        %v832 = vshrl.u32 %v831, 7
        %v833 = vsub.s32 4, %v832
        %v834 = vrot.slane %v786, %v833
        %v835 = vmul.f32 %v784, %v830
        %v836 = vmul.f32 %v786, %v834
        %v837 = vmul.f32 %v788, %v830
        %v838 = vmul.f32 %v790, %v834
        %v839 = vmul.f32 %v792, %v830
        %v840 = vmul.f32 %v794, %v834
        %v841 = vmul.f32 %v796, %v830
        %v842 = vmul.f32 %v798, %v834
        %v843 = vmul.f32 %v800, %v830
        %v844 = vmul.f32 %v802, %v834
        %v845 = vmul.f32 %v804, %v830
        %v846 = vmul.f32 %v806, %v834
        %v847 = vmul.f32 %v808, %v830
        %v848 = vmul.f32 %v810, %v834
        %v849 = vmul.f32 %v812, %v830
        %v850 = vmul.f32 %v814, %v834
        %v851 = vmul.f32 %v816, %v830
        %v852 = vmul.f32 %v818, %v834
        %v853 = vmul.f32 %v820, %v830
        %v854 = vmul.f32 %v822, %v834
        %v855 = vmul.f32 %v824, %v830
        %v856 = vmul.f32 %v826, %v834
        %v857 = vpack.c.bf16 %v837, %v835
        %v858 = vpack.c.bf16 %v838, %v836
        %v859 = vpack.c.bf16 %v841, %v839
        %v860 = vpack.c.bf16 %v842, %v840
        %v861 = vpack.c.bf16 %v845, %v843
        %v862 = vpack.c.bf16 %v846, %v844
        %v863 = vpack.c.bf16 %v849, %v847
        %v864 = vpack.c.bf16 %v850, %v848
        %v865 = vpack.c.bf16 %v853, %v851
        %v866 = vpack.c.bf16 %v854, %v852
        %v867 = vpack.c.bf16 %v855, %v855
        %v868 = vpack.c.bf16 %v856, %v856
        %v881 = vunpack.c.l.b16 %v857
        %v882 = vunpack.c.l.b16 %v858
        %v883 = vunpack.c.h.b16 %v857
        %v884 = vunpack.c.h.b16 %v858
        %v885 = vunpack.c.l.b16 %v859
        %v886 = vunpack.c.l.b16 %v860
        %v887 = vunpack.c.h.b16 %v859
        %v888 = vunpack.c.h.b16 %v860
        %v889 = vunpack.c.l.b16 %v861
        %v890 = vunpack.c.l.b16 %v862
        %v891 = vunpack.c.h.b16 %v861
        %v892 = vunpack.c.h.b16 %v862
        %v893 = vunpack.c.l.b16 %v863
        %v894 = vunpack.c.l.b16 %v864
        %v895 = vunpack.c.h.b16 %v863
        %v896 = vunpack.c.h.b16 %v864
        %v897 = vunpack.c.l.b16 %v865
        %v898 = vunpack.c.l.b16 %v866
        %v899 = vunpack.c.h.b16 %v865
        %v900 = vunpack.c.h.b16 %v866
        %v901 = vunpack.c.l.b16 %v867
        %v902 = vunpack.c.l.b16 %v868
        %v903 = vpack.c.b16 %v882, %v881
        %v904 = vpack.c.b16 %v884, %v883
        %v905 = vpack.c.b16 %v886, %v885
        %v906 = vpack.c.b16 %v888, %v887
        %v907 = vpack.c.b16 %v890, %v889
        %v908 = vpack.c.b16 %v892, %v891
        %v909 = vpack.c.b16 %v894, %v893
        %v910 = vpack.c.b16 %v896, %v895
        %v911 = vpack.c.b16 %v898, %v897
        %v912 = vpack.c.b16 %v900, %v899
        %v913 = vpack.c.b16 %v902, %v901
        %v915 = vshrl.u32 %v903, 16
        %v917 = vrot.slane %v915, 6
        %v918 = vshll.u32 %v903, 16
        %v920 = vrot.slane %v918, 7
        %v921 = vor.u32 %v917, %v920
        %v922 = vrot.slane %v921, 4
        %v924 = vshrl.u32 %v904, 16
        %v926 = vrot.slane %v924, 6
        %v927 = vshll.u32 %v904, 16
        %v929 = vrot.slane %v927, 7
        %v930 = vor.u32 %v926, %v929
        %v931 = vsel %vm502, %v922, %v930
        %v932 = vrot.slane %v930, 4
        %v934 = vshrl.u32 %v905, 16
        %v936 = vrot.slane %v934, 6
        %v937 = vshll.u32 %v905, 16
        %v939 = vrot.slane %v937, 7
        %v940 = vor.u32 %v936, %v939
        %v941 = vsel %vm502, %v932, %v940
        %v942 = vrot.slane %v940, 4
        %v944 = vshrl.u32 %v906, 16
        %v946 = vrot.slane %v944, 6
        %v947 = vshll.u32 %v906, 16
        %v949 = vrot.slane %v947, 7
        %v950 = vor.u32 %v946, %v949
        %v951 = vsel %vm502, %v942, %v950
        %v952 = vrot.slane %v950, 4
        %v954 = vshrl.u32 %v907, 16
        %v956 = vrot.slane %v954, 6
        %v957 = vshll.u32 %v907, 16
        %v959 = vrot.slane %v957, 7
        %v960 = vor.u32 %v956, %v959
        %v961 = vsel %vm502, %v952, %v960
        %v962 = vrot.slane %v960, 4
        %v964 = vshrl.u32 %v908, 16
        %v966 = vrot.slane %v964, 6
        %v967 = vshll.u32 %v908, 16
        %v969 = vrot.slane %v967, 7
        %v970 = vor.u32 %v966, %v969
        %v971 = vsel %vm502, %v962, %v970
        %v972 = vrot.slane %v970, 4
        %v974 = vshrl.u32 %v909, 16
        %v976 = vrot.slane %v974, 6
        %v977 = vshll.u32 %v909, 16
        %v979 = vrot.slane %v977, 7
        %v980 = vor.u32 %v976, %v979
        %v981 = vsel %vm502, %v972, %v980
        %v982 = vrot.slane %v980, 4
        %v984 = vshrl.u32 %v910, 16
        %v986 = vrot.slane %v984, 6
        %v987 = vshll.u32 %v910, 16
        %v989 = vrot.slane %v987, 7
        %v990 = vor.u32 %v986, %v989
        %v991 = vsel %vm502, %v982, %v990
        %v992 = vrot.slane %v990, 4
        %v994 = vshrl.u32 %v911, 16
        %v996 = vrot.slane %v994, 6
        %v997 = vshll.u32 %v911, 16
        %v999 = vrot.slane %v997, 7
        %v1000 = vor.u32 %v996, %v999
        %v1001 = vsel %vm502, %v992, %v1000
        %v1002 = vrot.slane %v1000, 4
        %v1004 = vshrl.u32 %v912, 16
        %v1006 = vrot.slane %v1004, 6
        %v1007 = vshll.u32 %v912, 16
        %v1009 = vrot.slane %v1007, 7
        %v1010 = vor.u32 %v1006, %v1009
        %v1011 = vsel %vm502, %v1002, %v1010
        %v1012 = vrot.slane %v1010, 4
        %v1014 = vshrl.u32 %v913, 16
        %v1016 = vrot.slane %v1014, 6
        %v1017 = vshll.u32 %v913, 16
        %v1019 = vrot.slane %v1017, 7
        %v1020 = vor.u32 %v1016, %v1019
        %v1021 = vsel %vm502, %v1012, %v1020
        %s1032 = scalar_lea.vmem %s174, 80 [#allocation4]
        %1033 = vst [vmem:[%s1032] sm:$0xff] %v931
        %1034 = vst [vmem:[%s1032 + $0x8] sm:$0xff] %v941
        %1035 = vst [vmem:[%s1032 + $0x10] sm:$0xff] %v951
        %1036 = vst [vmem:[%s1032 + $0x18] sm:$0xff] %v961
        %1037 = vst [vmem:[%s1032 + $0x20] sm:$0xff] %v971
        %1038 = vst [vmem:[%s1032 + $0x28] sm:$0xff] %v981
        %1039 = vst [vmem:[%s1032 + $0x30] sm:$0xff] %v991
        %1040 = vst [vmem:[%s1032 + $0x38] sm:$0xff] %v1001
        %1041 = vst [vmem:[%s1032 + $0x40] sm:$0xff] %v1011
        %1042 = vst [vmem:[%s1032 + $0x48] sm:$0xff] %v1021
        %s1043 = scalar_lea.vmem %s183, 352
        %v1044 = vld [vmem:[%s1043] sm:$0x3]
        %v1045 = vld [vmem:[%s1043 + $0x8] sm:$0x3]
        %v1046 = vxor.u32 %v1044, 2147483648
        %v1047 = vxor.u32 %v1045, 2147483648
        %v1048 = vmul.f32 %v1046, 1.442695
        %v1049 = vpow.pop %v1048
        %v1050 = vmul.f32 %v1047, 1.442695
        %v1051 = vpow.pop %v1050
        %v1052 = vadd.f32 %v1049, 1.0
        %v1053 = vadd.f32 %v1051, 1.0
        %v1054 = vrcp.pop %v1052
        %v1055 = vmul.f32 1.0, %v1054
        %v1056 = vrcp.pop %v1053
        %v1057 = vmul.f32 1.0, %v1056
        %v1058 = vmul.f32 %v1055, 0.065625
        %v1059 = vmul.f32 %v1057, 0.065625
        %v1060 = vadd.f32 %v1058, %v217
        %v1061 = vadd.f32 %v1059, %v218
        %v1062 = vsel %vm192, 0.3125, 0.21875
        %v1063 = vld [vmem:[%s1043] sm:$0xc]
        %v1064 = vld [vmem:[%s1043 + $0x8] sm:$0xc]
        %v1065 = vmul.f32 %v1063, 1.442695
        %v1066 = vpow.pop %v1065
        %v1067 = vmul.f32 %v1064, 1.442695
        %v1068 = vpow.pop %v1067
        %v1070 = vrot.slane %v1062, 6
        %v1072 = vmul.f32 %v1066, %v1070
        %v1073 = vmul.f32 %v1068, %v1070
        %v1076 = vcombine.low %v1060, %v1061
        %s1078 = scalar_lea.vmem %s167, 16 [#allocation2]
        %1079 = vst [vmem:[%s1078] sm:$0x33] %v1076
        %v1082 = vcombine.low %v1072, %v1073
        %1084 = vst [vmem:[%s1078] sm:$0xcc] %v1082
        %v1085 = vld [vmem:[%s1043] sm:$0xf0]
        %v1086 = vld [vmem:[%s1043 + $0x8] sm:$0xf0]
        %v1087 = vld [vmem:[%s1043 + $0x10] sm:$0xff]
        %v1088 = vld [vmem:[%s1043 + $0x18] sm:$0xff]
        %v1089 = vld [vmem:[%s1043 + $0x20] sm:$0xff]
        %v1090 = vld [vmem:[%s1043 + $0x28] sm:$0xff]
        %v1091 = vld [vmem:[%s1043 + $0x30] sm:$0xff]
        %v1092 = vld [vmem:[%s1043 + $0x38] sm:$0xff]
        %v1093 = vld [vmem:[%s1043 + $0x40] sm:$0xff]
        %v1094 = vld [vmem:[%s1043 + $0x48] sm:$0xff]
        %v1095 = vld [vmem:[%s1043 + $0x50] sm:$0xff]
        %v1096 = vld [vmem:[%s1043 + $0x58] sm:$0xff]
        %v1097 = vld [vmem:[%s1043 + $0x60] sm:$0xff]
        %v1098 = vld [vmem:[%s1043 + $0x68] sm:$0xff]
        %v1099 = vld [vmem:[%s1043 + $0x70] sm:$0xff]
        %v1100 = vld [vmem:[%s1043 + $0x78] sm:$0xff]
        %v1101 = vld [vmem:[%s1043 + $0x80] sm:$0xff]
        %v1102 = vld [vmem:[%s1043 + $0x88] sm:$0xff]
        %v1103 = vld [vmem:[%s1043 + $0x90] sm:$0xff]
        %v1104 = vld [vmem:[%s1043 + $0x98] sm:$0xff]
        %v1105 = vld [vmem:[%s1043 + $0xa0] sm:$0x1f]
        %v1106 = vld [vmem:[%s1043 + $0xa8] sm:$0x1f]
        %v1107 = vxor.u32 %v1085, 2147483648
        %v1108 = vxor.u32 %v1086, 2147483648
        %v1109 = vxor.u32 %v1087, 2147483648
        %v1110 = vxor.u32 %v1088, 2147483648
        %v1111 = vxor.u32 %v1089, 2147483648
        %v1112 = vxor.u32 %v1090, 2147483648
        %v1113 = vxor.u32 %v1091, 2147483648
        %v1114 = vxor.u32 %v1092, 2147483648
        %v1115 = vxor.u32 %v1093, 2147483648
        %v1116 = vxor.u32 %v1094, 2147483648
        %v1117 = vxor.u32 %v1095, 2147483648
        %v1118 = vxor.u32 %v1096, 2147483648
        %v1119 = vxor.u32 %v1097, 2147483648
        %v1120 = vxor.u32 %v1098, 2147483648
        %v1121 = vxor.u32 %v1099, 2147483648
        %v1122 = vxor.u32 %v1100, 2147483648
        %v1123 = vxor.u32 %v1101, 2147483648
        %v1124 = vxor.u32 %v1102, 2147483648
        %v1125 = vxor.u32 %v1103, 2147483648
        %v1126 = vxor.u32 %v1104, 2147483648
        %v1127 = vxor.u32 %v1105, 2147483648
        %v1128 = vxor.u32 %v1106, 2147483648
        %v1129 = vmul.f32 %v1107, 1.442695
        %v1130 = vpow.pop %v1129
        %v1131 = vmul.f32 %v1108, 1.442695
        %v1132 = vpow.pop %v1131
        %v1133 = vmul.f32 %v1109, 1.442695
        %v1134 = vpow.pop %v1133
        %v1135 = vmul.f32 %v1110, 1.442695
        %v1136 = vpow.pop %v1135
        %v1137 = vmul.f32 %v1111, 1.442695
        %v1138 = vpow.pop %v1137
        %v1139 = vmul.f32 %v1112, 1.442695
        %v1140 = vpow.pop %v1139
        %v1141 = vmul.f32 %v1113, 1.442695
        %v1142 = vpow.pop %v1141
        %v1143 = vmul.f32 %v1114, 1.442695
        %v1144 = vpow.pop %v1143
        %v1145 = vmul.f32 %v1115, 1.442695
        %v1146 = vpow.pop %v1145
        %v1147 = vmul.f32 %v1116, 1.442695
        %v1148 = vpow.pop %v1147
        %v1149 = vmul.f32 %v1117, 1.442695
        %v1150 = vpow.pop %v1149
        %v1151 = vmul.f32 %v1118, 1.442695
        %v1152 = vpow.pop %v1151
        %v1153 = vmul.f32 %v1119, 1.442695
        %v1154 = vpow.pop %v1153
        %v1155 = vmul.f32 %v1120, 1.442695
        %v1156 = vpow.pop %v1155
        %v1157 = vmul.f32 %v1121, 1.442695
        %v1158 = vpow.pop %v1157
        %v1159 = vmul.f32 %v1122, 1.442695
        %v1160 = vpow.pop %v1159
        %v1161 = vmul.f32 %v1123, 1.442695
        %v1162 = vpow.pop %v1161
        %v1163 = vmul.f32 %v1124, 1.442695
        %v1164 = vpow.pop %v1163
        %v1165 = vmul.f32 %v1125, 1.442695
        %v1166 = vpow.pop %v1165
        %v1167 = vmul.f32 %v1126, 1.442695
        %v1168 = vpow.pop %v1167
        %v1169 = vmul.f32 %v1127, 1.442695
        %v1170 = vpow.pop %v1169
        %v1171 = vmul.f32 %v1128, 1.442695
        %v1172 = vpow.pop %v1171
        %v1173 = vadd.f32 %v1130, 1.0
        %v1174 = vadd.f32 %v1132, 1.0
        %v1175 = vadd.f32 %v1134, 1.0
        %v1176 = vadd.f32 %v1136, 1.0
        %v1177 = vadd.f32 %v1138, 1.0
        %v1178 = vadd.f32 %v1140, 1.0
        %v1179 = vadd.f32 %v1142, 1.0
        %v1180 = vadd.f32 %v1144, 1.0
        %v1181 = vadd.f32 %v1146, 1.0
        %v1182 = vadd.f32 %v1148, 1.0
        %v1183 = vadd.f32 %v1150, 1.0
        %v1184 = vadd.f32 %v1152, 1.0
        %v1185 = vadd.f32 %v1154, 1.0
        %v1186 = vadd.f32 %v1156, 1.0
        %v1187 = vadd.f32 %v1158, 1.0
        %v1188 = vadd.f32 %v1160, 1.0
        %v1189 = vadd.f32 %v1162, 1.0
        %v1190 = vadd.f32 %v1164, 1.0
        %v1191 = vadd.f32 %v1166, 1.0
        %v1192 = vadd.f32 %v1168, 1.0
        %v1193 = vadd.f32 %v1170, 1.0
        %v1194 = vadd.f32 %v1172, 1.0
        %v1195 = vrcp.pop %v1173
        %v1196 = vmul.f32 1.0, %v1195
        %v1197 = vrcp.pop %v1174
        %v1198 = vmul.f32 1.0, %v1197
        %v1199 = vrcp.pop %v1175
        %v1200 = vmul.f32 1.0, %v1199
        %v1201 = vrcp.pop %v1176
        %v1202 = vmul.f32 1.0, %v1201
        %v1203 = vrcp.pop %v1177
        %v1204 = vmul.f32 1.0, %v1203
        %v1205 = vrcp.pop %v1178
        %v1206 = vmul.f32 1.0, %v1205
        %v1207 = vrcp.pop %v1179
        %v1208 = vmul.f32 1.0, %v1207
        %v1209 = vrcp.pop %v1180
        %v1210 = vmul.f32 1.0, %v1209
        %v1211 = vrcp.pop %v1181
        %v1212 = vmul.f32 1.0, %v1211
        %v1213 = vrcp.pop %v1182
        %v1214 = vmul.f32 1.0, %v1213
        %v1215 = vrcp.pop %v1183
        %v1216 = vmul.f32 1.0, %v1215
        %v1217 = vrcp.pop %v1184
        %v1218 = vmul.f32 1.0, %v1217
        %v1219 = vrcp.pop %v1185
        %v1220 = vmul.f32 1.0, %v1219
        %v1221 = vrcp.pop %v1186
        %v1222 = vmul.f32 1.0, %v1221
        %v1223 = vrcp.pop %v1187
        %v1224 = vmul.f32 1.0, %v1223
        %v1225 = vrcp.pop %v1188
        %v1226 = vmul.f32 1.0, %v1225
        %v1227 = vrcp.pop %v1189
        %v1228 = vmul.f32 1.0, %v1227
        %v1229 = vrcp.pop %v1190
        %v1230 = vmul.f32 1.0, %v1229
        %v1231 = vrcp.pop %v1191
        %v1232 = vmul.f32 1.0, %v1231
        %v1233 = vrcp.pop %v1192
        %v1234 = vmul.f32 1.0, %v1233
        %v1235 = vrcp.pop %v1193
        %v1236 = vmul.f32 1.0, %v1235
        %v1237 = vrcp.pop %v1194
        %v1238 = vmul.f32 1.0, %v1237
        %v1239 = vlaneseq
        %v1240 = vshrl.u32 %v1239, 7
        %v1241 = vsub.s32 4, %v1240
        %v1242 = vrot.slane %v1196, %v1241
        %v1243 = vlaneseq
        %v1244 = vshrl.u32 %v1243, 7
        %v1245 = vsub.s32 4, %v1244
        %v1246 = vrot.slane %v1198, %v1245
        %v1247 = vmul.f32 %v1196, %v1242
        %v1248 = vmul.f32 %v1198, %v1246
        %v1249 = vmul.f32 %v1200, %v1242
        %v1250 = vmul.f32 %v1202, %v1246
        %v1251 = vmul.f32 %v1204, %v1242
        %v1252 = vmul.f32 %v1206, %v1246
        %v1253 = vmul.f32 %v1208, %v1242
        %v1254 = vmul.f32 %v1210, %v1246
        %v1255 = vmul.f32 %v1212, %v1242
        %v1256 = vmul.f32 %v1214, %v1246
        %v1257 = vmul.f32 %v1216, %v1242
        %v1258 = vmul.f32 %v1218, %v1246
        %v1259 = vmul.f32 %v1220, %v1242
        %v1260 = vmul.f32 %v1222, %v1246
        %v1261 = vmul.f32 %v1224, %v1242
        %v1262 = vmul.f32 %v1226, %v1246
        %v1263 = vmul.f32 %v1228, %v1242
        %v1264 = vmul.f32 %v1230, %v1246
        %v1265 = vmul.f32 %v1232, %v1242
        %v1266 = vmul.f32 %v1234, %v1246
        %v1267 = vmul.f32 %v1236, %v1242
        %v1268 = vmul.f32 %v1238, %v1246
        %v1269 = vpack.c.bf16 %v1249, %v1247
        %v1270 = vpack.c.bf16 %v1250, %v1248
        %v1271 = vpack.c.bf16 %v1253, %v1251
        %v1272 = vpack.c.bf16 %v1254, %v1252
        %v1273 = vpack.c.bf16 %v1257, %v1255
        %v1274 = vpack.c.bf16 %v1258, %v1256
        %v1275 = vpack.c.bf16 %v1261, %v1259
        %v1276 = vpack.c.bf16 %v1262, %v1260
        %v1277 = vpack.c.bf16 %v1265, %v1263
        %v1278 = vpack.c.bf16 %v1266, %v1264
        %v1279 = vpack.c.bf16 %v1267, %v1267
        %v1280 = vpack.c.bf16 %v1268, %v1268
        %v1293 = vunpack.c.l.b16 %v1269
        %v1294 = vunpack.c.l.b16 %v1270
        %v1295 = vunpack.c.h.b16 %v1269
        %v1296 = vunpack.c.h.b16 %v1270
        %v1297 = vunpack.c.l.b16 %v1271
        %v1298 = vunpack.c.l.b16 %v1272
        %v1299 = vunpack.c.h.b16 %v1271
        %v1300 = vunpack.c.h.b16 %v1272
        %v1301 = vunpack.c.l.b16 %v1273
        %v1302 = vunpack.c.l.b16 %v1274
        %v1303 = vunpack.c.h.b16 %v1273
        %v1304 = vunpack.c.h.b16 %v1274
        %v1305 = vunpack.c.l.b16 %v1275
        %v1306 = vunpack.c.l.b16 %v1276
        %v1307 = vunpack.c.h.b16 %v1275
        %v1308 = vunpack.c.h.b16 %v1276
        %v1309 = vunpack.c.l.b16 %v1277
        %v1310 = vunpack.c.l.b16 %v1278
        %v1311 = vunpack.c.h.b16 %v1277
        %v1312 = vunpack.c.h.b16 %v1278
        %v1313 = vunpack.c.l.b16 %v1279
        %v1314 = vunpack.c.l.b16 %v1280
        %v1315 = vpack.c.b16 %v1294, %v1293
        %v1316 = vpack.c.b16 %v1296, %v1295
        %v1317 = vpack.c.b16 %v1298, %v1297
        %v1318 = vpack.c.b16 %v1300, %v1299
        %v1319 = vpack.c.b16 %v1302, %v1301
        %v1320 = vpack.c.b16 %v1304, %v1303
        %v1321 = vpack.c.b16 %v1306, %v1305
        %v1322 = vpack.c.b16 %v1308, %v1307
        %v1323 = vpack.c.b16 %v1310, %v1309
        %v1324 = vpack.c.b16 %v1312, %v1311
        %v1325 = vpack.c.b16 %v1314, %v1313
        %v1327 = vshrl.u32 %v1315, 16
        %v1329 = vrot.slane %v1327, 6
        %v1330 = vshll.u32 %v1315, 16
        %v1332 = vrot.slane %v1330, 7
        %v1333 = vor.u32 %v1329, %v1332
        %v1334 = vrot.slane %v1333, 4
        %v1336 = vshrl.u32 %v1316, 16
        %v1338 = vrot.slane %v1336, 6
        %v1339 = vshll.u32 %v1316, 16
        %v1341 = vrot.slane %v1339, 7
        %v1342 = vor.u32 %v1338, %v1341
        %v1343 = vsel %vm502, %v1334, %v1342
        %v1344 = vrot.slane %v1342, 4
        %v1346 = vshrl.u32 %v1317, 16
        %v1348 = vrot.slane %v1346, 6
        %v1349 = vshll.u32 %v1317, 16
        %v1351 = vrot.slane %v1349, 7
        %v1352 = vor.u32 %v1348, %v1351
        %v1353 = vsel %vm502, %v1344, %v1352
        %v1354 = vrot.slane %v1352, 4
        %v1356 = vshrl.u32 %v1318, 16
        %v1358 = vrot.slane %v1356, 6
        %v1359 = vshll.u32 %v1318, 16
        %v1361 = vrot.slane %v1359, 7
        %v1362 = vor.u32 %v1358, %v1361
        %v1363 = vsel %vm502, %v1354, %v1362
        %v1364 = vrot.slane %v1362, 4
        %v1366 = vshrl.u32 %v1319, 16
        %v1368 = vrot.slane %v1366, 6
        %v1369 = vshll.u32 %v1319, 16
        %v1371 = vrot.slane %v1369, 7
        %v1372 = vor.u32 %v1368, %v1371
        %v1373 = vsel %vm502, %v1364, %v1372
        %v1374 = vrot.slane %v1372, 4
        %v1376 = vshrl.u32 %v1320, 16
        %v1378 = vrot.slane %v1376, 6
        %v1379 = vshll.u32 %v1320, 16
        %v1381 = vrot.slane %v1379, 7
        %v1382 = vor.u32 %v1378, %v1381
        %v1383 = vsel %vm502, %v1374, %v1382
        %v1384 = vrot.slane %v1382, 4
        %v1386 = vshrl.u32 %v1321, 16
        %v1388 = vrot.slane %v1386, 6
        %v1389 = vshll.u32 %v1321, 16
        %v1391 = vrot.slane %v1389, 7
        %v1392 = vor.u32 %v1388, %v1391
        %v1393 = vsel %vm502, %v1384, %v1392
        %v1394 = vrot.slane %v1392, 4
        %v1396 = vshrl.u32 %v1322, 16
        %v1398 = vrot.slane %v1396, 6
        %v1399 = vshll.u32 %v1322, 16
        %v1401 = vrot.slane %v1399, 7
        %v1402 = vor.u32 %v1398, %v1401
        %v1403 = vsel %vm502, %v1394, %v1402
        %v1404 = vrot.slane %v1402, 4
        %v1406 = vshrl.u32 %v1323, 16
        %v1408 = vrot.slane %v1406, 6
        %v1409 = vshll.u32 %v1323, 16
        %v1411 = vrot.slane %v1409, 7
        %v1412 = vor.u32 %v1408, %v1411
        %v1413 = vsel %vm502, %v1404, %v1412
        %v1414 = vrot.slane %v1412, 4
        %v1416 = vshrl.u32 %v1324, 16
        %v1418 = vrot.slane %v1416, 6
        %v1419 = vshll.u32 %v1324, 16
        %v1421 = vrot.slane %v1419, 7
        %v1422 = vor.u32 %v1418, %v1421
        %v1423 = vsel %vm502, %v1414, %v1422
        %v1424 = vrot.slane %v1422, 4
        %v1426 = vshrl.u32 %v1325, 16
        %v1428 = vrot.slane %v1426, 6
        %v1429 = vshll.u32 %v1325, 16
        %v1431 = vrot.slane %v1429, 7
        %v1432 = vor.u32 %v1428, %v1431
        %v1433 = vsel %vm502, %v1424, %v1432
        %s1444 = scalar_lea.vmem %s174, 160 [#allocation4]
        %1445 = vst [vmem:[%s1444] sm:$0xff] %v1343
        %1446 = vst [vmem:[%s1444 + $0x8] sm:$0xff] %v1353
        %1447 = vst [vmem:[%s1444 + $0x10] sm:$0xff] %v1363
        %1448 = vst [vmem:[%s1444 + $0x18] sm:$0xff] %v1373
        %1449 = vst [vmem:[%s1444 + $0x20] sm:$0xff] %v1383
        %1450 = vst [vmem:[%s1444 + $0x28] sm:$0xff] %v1393
        %1451 = vst [vmem:[%s1444 + $0x30] sm:$0xff] %v1403
        %1452 = vst [vmem:[%s1444 + $0x38] sm:$0xff] %v1413
        %1453 = vst [vmem:[%s1444 + $0x40] sm:$0xff] %v1423
        %1454 = vst [vmem:[%s1444 + $0x48] sm:$0xff] %v1433
        %s1455 = sand.u32 %s70, 1
        %s1456 = scalar_lea.sflag [#allocation3], %s1455
        %s1457 = sand.u32 %s70, 1
        %s1458 = smul.addr %s1457, 24
        %s1459 = scalar_lea.vmem [#allocation2], %s1458
        %s1460 = sand.u32 %s98, 1
        %s1461 = scalar_lea.sflag [#allocation5], %s1460
        %s1462 = sand.u32 %s98, 1
        %s1463 = smul.addr %s1462, 240
        %s1464 = scalar_lea.vmem [#allocation4], %s1463
        // Predicated region
        $region25: #{tpu_custom_call.1} parent=23 // pred_check
          %p1465 = pneg %p80
        $region26: #{tpu_custom_call.1} parent=23 // pred_check_branch
          %1467 = sbr.rel (%p1465) target = $region28
        $region27: #{tpu_custom_call.1} parent=23 // pred_region
          %s1468 = smul.u32 2, %s25
          %s1470 = ssub.s32 384, 384
          %1471 = vsyncadd %s1456, %s1470
          %s1472 = smul.addr %s24, 6
          %s1473 = sadd.s32 %s1468, %s1472
          %s1474 = smul.addr %s1473, 64
          %s1475 = scalar_lea.hbm %s1, %s1474
          %s1476 = sshll.u32 %s1459, 4
          %s1477 = int_to_ptr.vmem [resolvable:$true] %s1476
          %1482 = dma.vmem_to_hbm [thread:$0]  %s1477, 384, %s1475, %s1456, 128, 128, 8
        $region28: #{tpu_custom_call.1} parent=23 // pred_fallthru
          _
        // Predicated region
        $region29: #{tpu_custom_call.1} parent=23 // pred_check
          %p1483 = pneg %p108
        $region30: #{tpu_custom_call.1} parent=23 // pred_check_branch
          %1485 = sbr.rel (%p1483) target = $region32
        $region31: #{tpu_custom_call.1} parent=23 // pred_region
          %s1486 = smul.u32 2, %s25
          %s1488 = ssub.s32 3840, 3840
          %1489 = vsyncadd %s1461, %s1488
          %s1490 = smul.addr %s24, 60
          %s1491 = sadd.s32 %s1486, %s1490
          %s1492 = smul.addr %s1491, 64
          %s1493 = scalar_lea.hbm %s2, %s1492
          %s1494 = sshll.u32 %s1464, 4
          %s1495 = int_to_ptr.vmem [resolvable:$true] %s1494
          %1500 = dma.vmem_to_hbm [thread:$0]  %s1495, 3840, %s1493, %s1461, 128, 128, 8
        $region32: #{tpu_custom_call.1} parent=23 // pred_fallthru
          _
      $region24: #{tpu_custom_call.1} parent=5 // pred_fallthru
        _
      %p1501 = scmp.le.s32.totalorder 2, %s15
      // Predicated region
      $region33: #{tpu_custom_call.1} parent=5 // pred_check
        %p1502 = pneg %p1501
      $region34: #{tpu_custom_call.1} parent=5 // pred_check_branch
        %1504 = sbr.rel (%p1502) target = $region36
      $region35: #{tpu_custom_call.1} parent=5 // pred_region
        %s1505 = ssub.s32 %s15, 2
        // Predicated region
        $region37: #{tpu_custom_call.1} parent=35 // pred_check
          %p1506 = pneg %p86
        $region38: #{tpu_custom_call.1} parent=35 // pred_check_branch
          %1508 = sbr.rel (%p1506) target = $region40
        $region39: #{tpu_custom_call.1} parent=35 // pred_region
          %s1509 = sand.u32 %s71, 1
          %s1510 = scalar_lea.sflag [#allocation3], %s1509
          %s1511 = sand.u32 %s71, 1
          %s1512 = smul.addr %s1511, 24
          %s1513 = scalar_lea.vmem [#allocation2], %s1512
          %1514 = dma.done %s1510, 384
        $region40: #{tpu_custom_call.1} parent=35 // pred_fallthru
          _
        // Predicated region
        $region41: #{tpu_custom_call.1} parent=35 // pred_check
          %p1515 = pneg %p114
        $region42: #{tpu_custom_call.1} parent=35 // pred_check_branch
          %1517 = sbr.rel (%p1515) target = $region44
        $region43: #{tpu_custom_call.1} parent=35 // pred_region
          %s1518 = sand.u32 %s99, 1
          %s1519 = scalar_lea.sflag [#allocation5], %s1518
          %s1520 = sand.u32 %s99, 1
          %s1521 = smul.addr %s1520, 240
          %s1522 = scalar_lea.vmem [#allocation4], %s1521
          %1523 = dma.done %s1519, 3840
        $region44: #{tpu_custom_call.1} parent=35 // pred_fallthru
          _
      $region36: #{tpu_custom_call.1} parent=5 // pred_fallthru
        _
    $region6: #{tpu_custom_call.1} parent=1 // loop_footer
      %s19 = sadd.s32 1, %s15
    $region7: #{tpu_custom_call.1} parent=1 // loop_footer_branch
      %14 = sbr.rel target = $region3
    $region8: #{tpu_custom_call.1} parent=1 // loop_exit
      _
    %1524 = vsyncpa [#allocation3], 1
    %s1525 = scalar_lea.sflag [#allocation3], 1
    %1526 = vsyncpa %s1525, 1
    %1527 = vsyncpa [#allocation5], 1
    %s1528 = scalar_lea.sflag [#allocation5], 1
    %1529 = vsyncpa %s1528, 1

</llo_original>
